<compile_context>
chip_gen: v5e
topology: v5e:2x2
jax: 0.10.0
libtpu: 0.0.40
codegen_flags: <defaults>
</compile_context>

<pallas_src>
import math

import jax
import jax.numpy as jnp
from jax import lax
from jax.experimental import pallas as pl
from jax.experimental.pallas import tpu as pltpu

# ---------------- configuration (consistent with the module) ----------------
B = 2          # batch
N = 8          # tokens
C = 32         # embed_dim
H = 4          # num_heads
HD = C // H    # head_dim
MLP = 64       # mlp_dim
EPS = 1e-5     # nn.LayerNorm default eps
SCALE = HD ** (-0.5)

WQO_ROWS = 4 * H         # 3H per-head QKV weights + H per-head out-proj weights
WMV_ROWS = 2 * C + 8     # mlp_w1 (C rows) + mlp_w2 (C rows) + 8 rows of 1-D params


def _layernorm(x, gamma, beta):
    # PyTorch LayerNorm: biased variance over the last dim; gamma/beta (1, C).
    mean = jnp.mean(x, axis=-1, keepdims=True)
    var = jnp.mean((x - mean) ** 2, axis=-1, keepdims=True)
    return (x - mean) * lax.rsqrt(var + EPS) * gamma + beta


def _gelu_exact(x):
    # nn.GELU() default = exact erf formulation.
    return 0.5 * x * (1.0 + lax.erf(x * (1.0 / math.sqrt(2.0))))


def encoder_stack_kernel(x_ref, wqo_ref, wmv_ref, o_ref, act_ref):
    l = pl.program_id(0)

    @pl.when(l == 0)
    def _():
        act_ref[...] = x_ref[...].reshape(B * N, C).astype(jnp.float32)

    x = act_ref[...]                                   # (BN, C) resident activation

    wqo = wqo_ref[...]                                 # (16, HD, C) this layer's slab
    qkv_w = wqo[:3 * H]                                # (3H, HD, C)
    out_w = wqo[3 * H:]                                # (H, HD, C)

    wmv = wmv_ref[...]                                 # (72, MLP)
    mlp_w1 = wmv[0:C]                                  # (C, MLP)
    mlp_w2 = wmv[C:2 * C]                              # (C, MLP)   (PyTorch layout)
    vec = wmv[2 * C:2 * C + 8]                         # (8, MLP) packed 1-D params
    ln1_g, ln1_b = vec[0:1, :C], vec[1:2, :C]
    ln2_g, ln2_b = vec[2:3, :C], vec[3:4, :C]
    out_b, mlp_b2 = vec[4:5, :C], vec[5:6, :C]
    mlp_b1 = vec[6:7, :MLP]

    # ---- sublayer 1: x + Attn(LN1(x)) ---------------------------------------
    h = _layernorm(x, ln1_g, ln1_b)                    # (BN, C)

    # One fused (3H)-batched QKV projection; contraction on the lane-dense C axis.
    hb = jnp.broadcast_to(h, (3 * H, B * N, C))
    qkv = lax.dot_general(hb, qkv_w, (((2,), (2,)), ((0,), (0,))),
                          preferred_element_type=jnp.float32)        # (3H, BN, HD)
    # Tile-aligned regroup (BN splits at the sublane-tile boundary): q/k/v are
    # free leading-axis slices of size H*B afterwards.
    qkv = qkv.reshape(3 * H * B, N, HD)
    q, k, v = qkv[:H * B], qkv[H * B:2 * H * B], qkv[2 * H * B:]

    s = lax.dot_general(q, k, (((2,), (2,)), ((0,), (0,))),
                        preferred_element_type=jnp.float32) * SCALE  # (HB, N, N)
    s = s - jnp.max(s, axis=-1, keepdims=True)
    e = jnp.exp(s)
    # approx=True would route the divide to the EUP; kept exact for 1e-4 parity.
    p = e * pl.reciprocal(jnp.sum(e, axis=-1, keepdims=True), approx=False)

    a = lax.dot_general(p, v, (((2,), (1,)), ((0,), (0,))),
                        preferred_element_type=jnp.float32)          # (HB, N, HD)

    # Head-concat folded into the out-projection: H-batched (BN,HD)@(HD,C) then a
    # cheap leading-axis sum (kept batched to avoid a head->lane relayout).
    a = a.reshape(H, B * N, HD)
    pr = lax.dot_general(a, out_w, (((2,), (1,)), ((0,), (0,))),
                         preferred_element_type=jnp.float32)         # (H, BN, C)
    attn = jnp.sum(pr, axis=0) + out_b                               # (BN, C)

    x1 = x + attn                                      # dropout = identity (eval)

    # ---- sublayer 2: x + MLP(LN2(x)) ----------------------------------------
    h2 = _layernorm(x1, ln2_g, ln2_b)
    m = jnp.dot(h2, mlp_w1, preferred_element_type=jnp.float32) + mlp_b1   # (BN, MLP)
    m = _gelu_exact(m)
    y = lax.dot_general(m, mlp_w2, (((1,), (1,)), ((), ())),
                        preferred_element_type=jnp.float32) + mlp_b2       # (BN, C)
    y = x1 + y

    act_ref[...] = y                                   # carry to the next layer

    @pl.when(l == pl.num_programs(0) - 1)
    def _():
        o_ref[...] = y.reshape(B, N, C).astype(o_ref.dtype)


# ---------------- one-time parameter packing (hoisted out of hot path) -------
def pack_layer_params(params):
    """Pack one layer's PyTorch-layout params into two DMA slabs (call once)."""
    qkv_w = params["qkv_w"].reshape(3 * H, HD, C)          # C-last, no transpose
    out_w = params["out_w"].T.reshape(H, HD, C)
    wqo = jnp.concatenate([qkv_w, out_w], axis=0).astype(jnp.float32)  # (16, HD, C)

    wmv = jnp.zeros((WMV_ROWS, MLP), jnp.float32)
    wmv = wmv.at[0:C, :].set(params["mlp_w1"].T)           # (C, MLP)
    wmv = wmv.at[C:2 * C, :].set(params["mlp_w2"])         # (C, MLP) PyTorch layout
    wmv = wmv.at[2 * C + 0, :C].set(params["ln1_g"])
    wmv = wmv.at[2 * C + 1, :C].set(params["ln1_b"])
    wmv = wmv.at[2 * C + 2, :C].set(params["ln2_g"])
    wmv = wmv.at[2 * C + 3, :C].set(params["ln2_b"])
    wmv = wmv.at[2 * C + 4, :C].set(params["out_b"])
    wmv = wmv.at[2 * C + 5, :C].set(params["mlp_b2"])
    wmv = wmv.at[2 * C + 6, :MLP].set(params["mlp_b1"])
    return wqo, wmv


def pack_stack_params(layer_params_list):
    packed = [pack_layer_params(p) for p in layer_params_list]
    wqo_stack = jnp.stack([w for w, _ in packed])          # (L, 16, HD, C)
    wmv_stack = jnp.stack([m for _, m in packed])          # (L, 72, MLP)
    return wqo_stack, wmv_stack


# ---------------- forward: L fused layers in ONE pallas_call -----------------
def transformer_encoder_stack(x, wqo_stack, wmv_stack):
    """x: (B, N, C) f32; weight slabs pre-packed with pack_stack_params."""
    num_layers = wqo_stack.shape[0]
    # TODO(synk): on v7x (2 TensorCores) with larger per-core work, add a
    # leading grid=(B,) axis with dimension_semantics=("parallel", "arbitrary")
    # to split the batch across cores; at this size it is pure overhead.
    return pl.pallas_call(
        encoder_stack_kernel,
        out_shape=jax.ShapeDtypeStruct((B, N, C), x.dtype),
        grid_spec=pltpu.PrefetchScalarGridSpec(
            num_scalar_prefetch=0,
            grid=(num_layers,),
            in_specs=[
                pl.BlockSpec((B, N, C), lambda l: (0, 0, 0)),              # resident
                pl.BlockSpec((None, WQO_ROWS, HD, C), lambda l: (l, 0, 0, 0)),
                pl.BlockSpec((None, WMV_ROWS, MLP), lambda l: (l, 0, 0)),
            ],
            out_specs=pl.BlockSpec((B, N, C), lambda l: (0, 0, 0)),
            scratch_shapes=[pltpu.VMEM((B * N, C), jnp.float32)],          # act carry
        ),
        compiler_params=pltpu.CompilerParams(
            dimension_semantics=("arbitrary",)),
    )(x, wqo_stack, wmv_stack)


def transformer_encoder_layer(x, wqo_stack, wmv_stack):
    """Single layer (matches the PyTorch module): just an L=1 stack."""
    return transformer_encoder_stack(x, wqo_stack, wmv_stack)


# ---------------- pure-JAX reference (sanity check) --------------------------
def reference(x, p):
    def ln(x, g, b):
        mu = x.mean(-1, keepdims=True)
        var = ((x - mu) ** 2).mean(-1, keepdims=True)
        return (x - mu) / jnp.sqrt(var + EPS) * g + b

    h = ln(x, p["ln1_g"], p["ln1_b"])
    qkv = h @ p["qkv_w"].T                                  # (B, N, 3C)
    qkv = qkv.reshape(B, N, 3, H, HD).transpose(2, 0, 3, 1, 4)
    q, k, v = qkv[0], qkv[1], qkv[2]                        # (B, H, N, HD)
    s = jnp.einsum("bhnd,bhmd->bhnm", q, k) * SCALE
    w = jax.nn.softmax(s, axis=-1)
    o = jnp.einsum("bhnm,bhmd->bhnd", w, v)
    o = o.transpose(0, 2, 1, 3).reshape(B, N, C)
    o = o @ p["out_w"].T + p["out_b"]
    x = x + o
    h2 = ln(x, p["ln2_g"], p["ln2_b"])
    m = h2 @ p["mlp_w1"].T + p["mlp_b1"]
    m = jax.nn.gelu(m, approximate=False)
    m = m @ p["mlp_w2"].T + p["mlp_b2"]
    return x + m


def _make_params(key):
    ks = jax.random.split(key, 7)
    return {
        "ln1_g": jnp.ones((C,), jnp.float32),
        "ln1_b": jnp.zeros((C,), jnp.float32),
        "qkv_w": 0.1 * jax.random.normal(ks[0], (3 * C, C), jnp.float32),
        "out_w": 0.1 * jax.random.normal(ks[1], (C, C), jnp.float32),
        "out_b": 0.01 * jax.random.normal(ks[2], (C,), jnp.float32),
        "ln2_g": jnp.ones((C,), jnp.float32),
        "ln2_b": jnp.zeros((C,), jnp.float32),
        "mlp_w1": 0.1 * jax.random.normal(ks[3], (MLP, C), jnp.float32),
        "mlp_b1": 0.01 * jax.random.normal(ks[4], (MLP,), jnp.float32),
        "mlp_w2": 0.1 * jax.random.normal(ks[5], (C, MLP), jnp.float32),
        "mlp_b2": 0.01 * jax.random.normal(ks[6], (C,), jnp.float32),
    }


if __name__ == "__main__":
    key = jax.random.PRNGKey(0)
    k0, k1, kx = jax.random.split(key, 3)

    params0 = _make_params(k0)
    params1 = _make_params(k1)
    x = jax.random.normal(kx, (B, N, C), jnp.float32)

    # ---- single layer (= the PyTorch module), L = 1 --------------------------
    wqo1, wmv1 = pack_stack_params([params0])           # one-time packing
    out = jax.block_until_ready(transformer_encoder_layer(x, wqo1, wmv1))
    ref = reference(x, params0)
    assert out.shape == (B, N, C)
    err1 = float(jnp.max(jnp.abs(out - ref)))
    assert jnp.allclose(out, ref, rtol=1e-4, atol=1e-4), err1

    # ---- fused 2-layer stack in ONE pallas_call (feedback item 1) ------------
    wqo2, wmv2 = pack_stack_params([params0, params1])  # one-time packing
    out2 = jax.block_until_ready(transformer_encoder_stack(x, wqo2, wmv2))
    ref2 = reference(reference(x, params0), params1)
    err2 = float(jnp.max(jnp.abs(out2 - ref2)))
    assert jnp.allclose(out2, ref2, rtol=1e-4, atol=1e-4), err2

    # TODO(synk): dropout is identity here (eval mode); training-mode dropout
    # would need pltpu.prng_seed / prng_random_bits masking.
    print("KERNEL_OK")
</pallas_src>

<mosaic_0001>
module attributes {stable_mosaic.version = 11 : i64} {
  func.func @encoder_stack_kernel(%arg0: i32, %arg1: memref<2x8x32xf32, #tpu.memory_space<vmem>>, %arg2: memref<1x16x8x32xf32, #tpu.memory_space<vmem>>, %arg3: memref<1x72x64xf32, #tpu.memory_space<vmem>>, %arg4: memref<2x8x32xf32, #tpu.memory_space<vmem>>, %arg5: memref<16x32xf32, #tpu.memory_space<vmem>>) attributes {dimension_semantics = [#tpu.dimension_semantics<arbitrary>], iteration_bounds = array<i64: 1>, scalar_prefetch = 0 : i64, scratch_operands = 1 : i64, tpu.core_type = #tpu.core_type<tc>, window_params = [{pipeline_mode = #tpu.pipeline_mode<synchronous>, transform_indices = @transform_0, window_bounds = array<i64: 2, 8, 32>}, {transform_indices = @transform_1, window_bounds = array<i64: 1, 16, 8, 32>}, {transform_indices = @transform_2, window_bounds = array<i64: 1, 72, 64>}, {pipeline_mode = #tpu.pipeline_mode<synchronous>, transform_indices = @transform_3, window_bounds = array<i64: 2, 8, 32>}]} {
    %c0_i32 = arith.constant 0 : i32
    %0 = arith.cmpi eq, %arg0, %c0_i32 : i32
    %1 = arith.extui %0 : i1 to i32
    %c0_i32_0 = arith.constant 0 : i32
    %2 = arith.cmpi ne, %1, %c0_i32_0 : i32
    scf.if %2 {
      %c0_35 = arith.constant 0 : index
      %c0_36 = arith.constant 0 : index
      %c0_37 = arith.constant 0 : index
      %110 = vector.load %arg1[%c0_35, %c0_36, %c0_37] : memref<2x8x32xf32, #tpu.memory_space<vmem>>, vector<2x8x32xf32>
      %111 = vector.shape_cast %110 : vector<2x8x32xf32> to vector<16x32xf32>
      %c0_38 = arith.constant 0 : index
      %c0_39 = arith.constant 0 : index
      %112 = vector.load %arg5[%c0_38, %c0_39] : memref<16x32xf32, #tpu.memory_space<vmem>>, vector<16x32xf32>
      tpu.vector_store %arg5[%c0_38, %c0_39], %111 {strides = array<i32>} : memref<16x32xf32, #tpu.memory_space<vmem>>, vector<16x32xf32>,
    } else {
    }
    %c0 = arith.constant 0 : index
    %c0_1 = arith.constant 0 : index
    %3 = vector.load %arg5[%c0, %c0_1] : memref<16x32xf32, #tpu.memory_space<vmem>>, vector<16x32xf32>
    %c0_2 = arith.constant 0 : index
    %c0_3 = arith.constant 0 : index
    %c0_4 = arith.constant 0 : index
    %c0_5 = arith.constant 0 : index
    %4 = vector.load %arg2[%c0_2, %c0_3, %c0_4, %c0_5] : memref<1x16x8x32xf32, #tpu.memory_space<vmem>>, vector<1x16x8x32xf32>
    %5 = vector.shape_cast %4 : vector<1x16x8x32xf32> to vector<16x8x32xf32>
    %6 = vector.extract_strided_slice %5 {offsets = [0, 0, 0], sizes = [12, 8, 32], strides = [1, 1, 1]} : vector<16x8x32xf32> to vector<12x8x32xf32>
    %7 = vector.extract_strided_slice %5 {offsets = [12, 0, 0], sizes = [4, 8, 32], strides = [1, 1, 1]} : vector<16x8x32xf32> to vector<4x8x32xf32>
    %c0_6 = arith.constant 0 : index
    %c0_7 = arith.constant 0 : index
    %c0_8 = arith.constant 0 : index
    %8 = vector.load %arg3[%c0_6, %c0_7, %c0_8] : memref<1x72x64xf32, #tpu.memory_space<vmem>>, vector<1x72x64xf32>
    %9 = vector.shape_cast %8 : vector<1x72x64xf32> to vector<72x64xf32>
    %10 = vector.extract_strided_slice %9 {offsets = [0, 0], sizes = [32, 64], strides = [1, 1]} : vector<72x64xf32> to vector<32x64xf32>
    %11 = vector.extract_strided_slice %9 {offsets = [32, 0], sizes = [32, 64], strides = [1, 1]} : vector<72x64xf32> to vector<32x64xf32>
    %12 = vector.extract_strided_slice %9 {offsets = [64, 0], sizes = [8, 64], strides = [1, 1]} : vector<72x64xf32> to vector<8x64xf32>
    %13 = vector.extract_strided_slice %12 {offsets = [0, 0], sizes = [1, 32], strides = [1, 1]} : vector<8x64xf32> to vector<1x32xf32>
    %14 = vector.extract_strided_slice %12 {offsets = [1, 0], sizes = [1, 32], strides = [1, 1]} : vector<8x64xf32> to vector<1x32xf32>
    %15 = vector.extract_strided_slice %12 {offsets = [2, 0], sizes = [1, 32], strides = [1, 1]} : vector<8x64xf32> to vector<1x32xf32>
    %16 = vector.extract_strided_slice %12 {offsets = [3, 0], sizes = [1, 32], strides = [1, 1]} : vector<8x64xf32> to vector<1x32xf32>
    %17 = vector.extract_strided_slice %12 {offsets = [4, 0], sizes = [1, 32], strides = [1, 1]} : vector<8x64xf32> to vector<1x32xf32>
    %18 = vector.extract_strided_slice %12 {offsets = [5, 0], sizes = [1, 32], strides = [1, 1]} : vector<8x64xf32> to vector<1x32xf32>
    %19 = vector.extract_strided_slice %12 {offsets = [6, 0], sizes = [1, 64], strides = [1, 1]} : vector<8x64xf32> to vector<1x64xf32>
    %cst = arith.constant dense<0.000000e+00> : vector<16xf32>
    %20 = vector.multi_reduction <add>, %3, %cst [1] : vector<16x32xf32> to vector<16xf32>
    %21 = vector.shape_cast %20 : vector<16xf32> to vector<16x1xf32>
    %cst_9 = arith.constant 3.200000e+01 : f32
    %22 = vector.broadcast %cst_9 : f32 to vector<16x1xf32>
    %23 = arith.divf %21, %22 : vector<16x1xf32>
    %24 = vector.broadcast %23 : vector<16x1xf32> to vector<16x32xf32>
    %25 = arith.subf %3, %24 : vector<16x32xf32>
    %26 = arith.mulf %25, %25 : vector<16x32xf32>
    %cst_10 = arith.constant dense<0.000000e+00> : vector<16xf32>
    %27 = vector.multi_reduction <add>, %26, %cst_10 [1] : vector<16x32xf32> to vector<16xf32>
    %28 = vector.shape_cast %27 : vector<16xf32> to vector<16x1xf32>
    %cst_11 = arith.constant 3.200000e+01 : f32
    %29 = vector.broadcast %cst_11 : f32 to vector<16x1xf32>
    %30 = arith.divf %28, %29 : vector<16x1xf32>
    %31 = vector.broadcast %23 : vector<16x1xf32> to vector<16x32xf32>
    %32 = arith.subf %3, %31 : vector<16x32xf32>
    %cst_12 = arith.constant 9.99999974E-6 : f32
    %33 = vector.broadcast %cst_12 : f32 to vector<16x1xf32>
    %34 = arith.addf %30, %33 : vector<16x1xf32>
    %35 = math.rsqrt %34 : vector<16x1xf32>
    %36 = vector.broadcast %35 : vector<16x1xf32> to vector<16x32xf32>
    %37 = arith.mulf %32, %36 : vector<16x32xf32>
    %38 = vector.broadcast %13 : vector<1x32xf32> to vector<16x32xf32>
    %39 = arith.mulf %37, %38 : vector<16x32xf32>
    %40 = vector.broadcast %14 : vector<1x32xf32> to vector<16x32xf32>
    %41 = arith.addf %39, %40 : vector<16x32xf32>
    %42 = vector.shape_cast %41 : vector<16x32xf32> to vector<1x16x32xf32>
    %43 = vector.broadcast %42 : vector<1x16x32xf32> to vector<12x16x32xf32>
    %cst_13 = arith.constant dense<0.000000e+00> : vector<12x16x8xf32>
    %44 = tpu.matmul %43, %6, %cst_13 {dimension_numbers = #tpu.dot_dimension_numbers<[2], [2], [1], [1], [0, 0, 0, 1, 1, 1], [0], [0]>} : vector<12x16x32xf32>, vector<12x8x32xf32>, vector<12x16x8xf32> -> vector<12x16x8xf32>
    %45 = vector.shape_cast %44 : vector<12x16x8xf32> to vector<24x8x8xf32>
    %46 = vector.extract_strided_slice %45 {offsets = [0, 0, 0], sizes = [8, 8, 8], strides = [1, 1, 1]} : vector<24x8x8xf32> to vector<8x8x8xf32>
    %47 = vector.extract_strided_slice %45 {offsets = [8, 0, 0], sizes = [8, 8, 8], strides = [1, 1, 1]} : vector<24x8x8xf32> to vector<8x8x8xf32>
    %48 = vector.extract_strided_slice %45 {offsets = [16, 0, 0], sizes = [8, 8, 8], strides = [1, 1, 1]} : vector<24x8x8xf32> to vector<8x8x8xf32>
    %cst_14 = arith.constant dense<0.000000e+00> : vector<8x8x8xf32>
    %49 = tpu.matmul %46, %47, %cst_14 {dimension_numbers = #tpu.dot_dimension_numbers<[2], [2], [1], [1], [0, 0, 0, 1, 1, 1], [0], [0]>} : vector<8x8x8xf32>, vector<8x8x8xf32>, vector<8x8x8xf32> -> vector<8x8x8xf32>
    %cst_15 = arith.constant 0.353553385 : f32
    %50 = vector.broadcast %cst_15 : f32 to vector<8x8x8xf32>
    %51 = arith.mulf %49, %50 : vector<8x8x8xf32>
    %cst_16 = arith.constant dense<0xFF800000> : vector<8x8xf32>
    %52 = vector.multi_reduction <maximumf>, %51, %cst_16 [2] : vector<8x8x8xf32> to vector<8x8xf32>
    %53 = vector.shape_cast %52 : vector<8x8xf32> to vector<8x8x1xf32>
    %54 = vector.broadcast %53 : vector<8x8x1xf32> to vector<8x8x8xf32>
    %55 = arith.subf %51, %54 : vector<8x8x8xf32>
    %56 = math.exp %55 : vector<8x8x8xf32>
    %cst_17 = arith.constant dense<0.000000e+00> : vector<8x8xf32>
    %57 = vector.multi_reduction <add>, %56, %cst_17 [2] : vector<8x8x8xf32> to vector<8x8xf32>
    %58 = vector.shape_cast %57 : vector<8x8xf32> to vector<8x8x1xf32>
    %59 = tpu.reciprocal %58 : vector<8x8x1xf32> -> vector<8x8x1xf32>
    %60 = vector.broadcast %59 : vector<8x8x1xf32> to vector<8x8x8xf32>
    %61 = arith.mulf %56, %60 : vector<8x8x8xf32>
    %cst_18 = arith.constant dense<0.000000e+00> : vector<8x8x8xf32>
    %62 = tpu.matmul %61, %48, %cst_18 {dimension_numbers = #tpu.dot_dimension_numbers<[2], [1], [1], [2], [0, 0, 0, 1, 1, 2], [0], [0]>} : vector<8x8x8xf32>, vector<8x8x8xf32>, vector<8x8x8xf32> -> vector<8x8x8xf32>
    %63 = vector.shape_cast %62 : vector<8x8x8xf32> to vector<4x16x8xf32>
    %cst_19 = arith.constant dense<0.000000e+00> : vector<4x16x32xf32>
    %64 = tpu.matmul %63, %7, %cst_19 {dimension_numbers = #tpu.dot_dimension_numbers<[2], [1], [1], [2], [0, 0, 0, 1, 1, 2], [0], [0]>} : vector<4x16x8xf32>, vector<4x8x32xf32>, vector<4x16x32xf32> -> vector<4x16x32xf32>
    %cst_20 = arith.constant dense<0.000000e+00> : vector<16x32xf32>
    %65 = vector.multi_reduction <add>, %64, %cst_20 [0] : vector<4x16x32xf32> to vector<16x32xf32>
    %66 = vector.broadcast %17 : vector<1x32xf32> to vector<16x32xf32>
    %67 = arith.addf %65, %66 : vector<16x32xf32>
    %68 = arith.addf %3, %67 : vector<16x32xf32>
    %cst_21 = arith.constant dense<0.000000e+00> : vector<16xf32>
    %69 = vector.multi_reduction <add>, %68, %cst_21 [1] : vector<16x32xf32> to vector<16xf32>
    %70 = vector.shape_cast %69 : vector<16xf32> to vector<16x1xf32>
    %cst_22 = arith.constant 3.200000e+01 : f32
    %71 = vector.broadcast %cst_22 : f32 to vector<16x1xf32>
    %72 = arith.divf %70, %71 : vector<16x1xf32>
    %73 = vector.broadcast %72 : vector<16x1xf32> to vector<16x32xf32>
    %74 = arith.subf %68, %73 : vector<16x32xf32>
    %75 = arith.mulf %74, %74 : vector<16x32xf32>
    %cst_23 = arith.constant dense<0.000000e+00> : vector<16xf32>
    %76 = vector.multi_reduction <add>, %75, %cst_23 [1] : vector<16x32xf32> to vector<16xf32>
    %77 = vector.shape_cast %76 : vector<16xf32> to vector<16x1xf32>
    %cst_24 = arith.constant 3.200000e+01 : f32
    %78 = vector.broadcast %cst_24 : f32 to vector<16x1xf32>
    %79 = arith.divf %77, %78 : vector<16x1xf32>
    %80 = vector.broadcast %72 : vector<16x1xf32> to vector<16x32xf32>
    %81 = arith.subf %68, %80 : vector<16x32xf32>
    %cst_25 = arith.constant 9.99999974E-6 : f32
    %82 = vector.broadcast %cst_25 : f32 to vector<16x1xf32>
    %83 = arith.addf %79, %82 : vector<16x1xf32>
    %84 = math.rsqrt %83 : vector<16x1xf32>
    %85 = vector.broadcast %84 : vector<16x1xf32> to vector<16x32xf32>
    %86 = arith.mulf %81, %85 : vector<16x32xf32>
    %87 = vector.broadcast %15 : vector<1x32xf32> to vector<16x32xf32>
    %88 = arith.mulf %86, %87 : vector<16x32xf32>
    %89 = vector.broadcast %16 : vector<1x32xf32> to vector<16x32xf32>
    %90 = arith.addf %88, %89 : vector<16x32xf32>
    %cst_26 = arith.constant dense<0.000000e+00> : vector<16x64xf32>
    %91 = tpu.matmul %90, %10, %cst_26 {dimension_numbers = #tpu.dot_dimension_numbers<[1], [0], [0], [1], [0, 0, 1, 1], [], []>} : vector<16x32xf32>, vector<32x64xf32>, vector<16x64xf32> -> vector<16x64xf32>
    %92 = vector.broadcast %19 : vector<1x64xf32> to vector<16x64xf32>
    %93 = arith.addf %91, %92 : vector<16x64xf32>
    %cst_27 = arith.constant 5.000000e-01 : f32
    %94 = vector.broadcast %cst_27 : f32 to vector<16x64xf32>
    %95 = arith.mulf %94, %93 : vector<16x64xf32>
    %cst_28 = arith.constant 0.707106769 : f32
    %96 = vector.broadcast %cst_28 : f32 to vector<16x64xf32>
    %97 = arith.mulf %93, %96 : vector<16x64xf32>
    %98 = math.erf %97 : vector<16x64xf32>
    %cst_29 = arith.constant 1.000000e+00 : f32
    %99 = vector.broadcast %cst_29 : f32 to vector<16x64xf32>
    %100 = arith.addf %99, %98 : vector<16x64xf32>
    %101 = arith.mulf %95, %100 : vector<16x64xf32>
    %cst_30 = arith.constant dense<0.000000e+00> : vector<16x32xf32>
    %102 = tpu.matmul %101, %11, %cst_30 {dimension_numbers = #tpu.dot_dimension_numbers<[1], [1], [0], [0], [0, 0, 1, 0], [], []>} : vector<16x64xf32>, vector<32x64xf32>, vector<16x32xf32> -> vector<16x32xf32>
    %103 = vector.broadcast %18 : vector<1x32xf32> to vector<16x32xf32>
    %104 = arith.addf %102, %103 : vector<16x32xf32>
    %105 = arith.addf %68, %104 : vector<16x32xf32>
    %c0_31 = arith.constant 0 : index
    %c0_32 = arith.constant 0 : index
    %106 = vector.load %arg5[%c0_31, %c0_32] : memref<16x32xf32, #tpu.memory_space<vmem>>, vector<16x32xf32>
    tpu.vector_store %arg5[%c0_31, %c0_32], %105 {strides = array<i32>} : memref<16x32xf32, #tpu.memory_space<vmem>>, vector<16x32xf32>,
    %c0_i32_33 = arith.constant 0 : i32
    %107 = arith.cmpi eq, %arg0, %c0_i32_33 : i32
    %108 = arith.extui %107 : i1 to i32
    %c0_i32_34 = arith.constant 0 : i32
    %109 = arith.cmpi ne, %108, %c0_i32_34 : i32
    scf.if %109 {
      %110 = vector.shape_cast %105 : vector<16x32xf32> to vector<2x8x32xf32>
      %c0_35 = arith.constant 0 : index
      %c0_36 = arith.constant 0 : index
      %c0_37 = arith.constant 0 : index
      %111 = vector.load %arg4[%c0_35, %c0_36, %c0_37] : memref<2x8x32xf32, #tpu.memory_space<vmem>>, vector<2x8x32xf32>
      tpu.vector_store %arg4[%c0_35, %c0_36, %c0_37], %110 {strides = array<i32>} : memref<2x8x32xf32, #tpu.memory_space<vmem>>, vector<2x8x32xf32>,
    } else {
    }
    return
  }
  func.func @transform_0(%arg0: i32) -> (i32, i32, i32) {
    %c0_i32 = arith.constant 0 : i32
    %c0_i32_0 = arith.constant 0 : i32
    %c0_i32_1 = arith.constant 0 : i32
    %c0_i32_2 = arith.constant 0 : i32
    return %c0_i32, %c0_i32_0, %c0_i32_1 : i32, i32, i32
  }
  func.func @transform_1(%arg0: i32) -> (i32, i32, i32, i32) {
    %c0_i32 = arith.constant 0 : i32
    %c0_i32_0 = arith.constant 0 : i32
    %c0_i32_1 = arith.constant 0 : i32
    %c0_i32_2 = arith.constant 0 : i32
    return %arg0, %c0_i32, %c0_i32_0, %c0_i32_1 : i32, i32, i32, i32
  }
  func.func @transform_2(%arg0: i32) -> (i32, i32, i32) {
    %c0_i32 = arith.constant 0 : i32
    %c0_i32_0 = arith.constant 0 : i32
    %c0_i32_1 = arith.constant 0 : i32
    return %arg0, %c0_i32, %c0_i32_0 : i32, i32, i32
  }
  func.func @transform_3(%arg0: i32) -> (i32, i32, i32) {
    %c0_i32 = arith.constant 0 : i32
    %c0_i32_0 = arith.constant 0 : i32
    %c0_i32_1 = arith.constant 0 : i32
    %c0_i32_2 = arith.constant 0 : i32
    return %c0_i32, %c0_i32_0, %c0_i32_1 : i32, i32, i32
  }
}

</mosaic_0001>

<llo_original>
// kernel: tpu_custom_call.1
$region0: #{tpu_custom_call.1}
  #allocation0 [shape = 'u32[]', space=smem, size = 0x4, offset = 0x4, fixed_abs, tag = 'smem constant byte address 0x4 - core index']
  #allocation1 [shape = 'u32[72,128]{1,0:T(1,128)}', space=vmem, size = 0x9000, scoped, tag = 'internal scratch']
  #allocation2 [shape = 'f32[16,32]{1,0:T(8,128)}', space=vmem, size = 0x2000, scoped, tag = 'scratch operand']
  %s0 = inlined_call_operand.hbm [shape: f32[2,8,32], index: 0, kind: input, shape index: {}]
  %s1 = inlined_call_operand.vmem [shape: f32[1,16,8,32], index: 1, kind: input, shape index: {}]
  %s2 = inlined_call_operand.vmem [shape: f32[1,72,64], index: 2, kind: input, shape index: {}]
  %s3 = inlined_call_operand.hbm [shape: f32[2,8,32], index: 3, kind: output, shape index: {}]
  %s4 = sld [smem:[#allocation0]]
  $region34: #{tpu_custom_call.1} parent=0
    _
  %s6 = ssub.s32 1, %s4
  %s7 = scalar_select 0, %s6, %s4
  $region1: #{tpu_custom_call.1} parent=0
    #allocation3 [shape = 'u8[8192]{0}', space=vmem, size = 0x2000, scoped, tag = 'input window, operand 0, single buffered']
    #allocation4 [shape = 's32[1]{0}', space=sflag, size = 0x4, scoped, tag = 'scoped memory for tpu_custom_call.1']
    #allocation5 [shape = 's32[1]{0}', space=sflag, size = 0x4, scoped, tag = 'scoped memory for tpu_custom_call.1']
    #allocation6 [shape = 'u8[8192]{0}', space=vmem, size = 0x2000, scoped, tag = 'output window, operand 0, single buffered']
    %8 = vsyncpa [#allocation4], 0
    %9 = vsyncpa [#allocation5], 0
    // Predicated region
    $region2: #{tpu_custom_call.1} parent=1 // pred_check
      _
    $region3: #{tpu_custom_call.1} parent=1 // pred_check_branch
      %11 = sbr.rel (0) target = $region5
    $region4: #{tpu_custom_call.1} parent=1 // pred_region
      %13 = vsyncadd [#allocation4], 0
      %s14 = sshll.u32 %s0, 4
      %s15 = int_to_ptr.hbm [resolvable:$true] %s14
      %s16 = sshll.u32 [#allocation3], 4
      %s17 = int_to_ptr.vmem [resolvable:$true] %s16
      %22 = dma.hbm_to_vmem [thread:$0]  %s15, 256, %s17, [#allocation4], 128, 128, 8
    $region5: #{tpu_custom_call.1} parent=1 // pred_fallthru
      _
    // Predicated region
    $region6: #{tpu_custom_call.1} parent=1 // pred_check
      _
    $region7: #{tpu_custom_call.1} parent=1 // pred_check_branch
      %24 = sbr.rel (0) target = $region9
    $region8: #{tpu_custom_call.1} parent=1 // pred_region
      _
    $region9: #{tpu_custom_call.1} parent=1 // pred_fallthru
      _
    // Predicated region
    $region10: #{tpu_custom_call.1} parent=1 // pred_check
      _
    $region11: #{tpu_custom_call.1} parent=1 // pred_check_branch
      %26 = sbr.rel (0) target = $region13
    $region12: #{tpu_custom_call.1} parent=1 // pred_region
      _
    $region13: #{tpu_custom_call.1} parent=1 // pred_fallthru
      _
    // Predicated region
    $region14: #{tpu_custom_call.1} parent=1 // pred_check
      _
    $region15: #{tpu_custom_call.1} parent=1 // pred_check_branch
      %28 = sbr.rel (0) target = $region17
    $region16: #{tpu_custom_call.1} parent=1 // pred_region
      %30 = dma.done [#allocation4], 256
    $region17: #{tpu_custom_call.1} parent=1 // pred_fallthru
      _
    %p31 = scmp.eq.s32.totalorder 0, 0
    // Predicated region
    $region18: #{tpu_custom_call.1} parent=1 // pred_check
      %p32 = pneg %p31
    $region19: #{tpu_custom_call.1} parent=1 // pred_check_branch
      %34 = sbr.rel (%p32) target = $region21
    $region20: #{tpu_custom_call.1} parent=1 // pred_region
      %v35 = vld [vmem:[#allocation3] sm:$0xff]
      %v36 = vld [vmem:[#allocation3 + $0x8] sm:$0xff]
      %vm37 = vcmask 261120
      %38 = vst.msk [vmem:[#allocation2] sm:$0xff] %vm37, %v35
      %39 = vst.msk [vmem:[#allocation2 + $0x8] sm:$0xff] %vm37, %v36
    $region21: #{tpu_custom_call.1} parent=1 // pred_fallthru
      _
    %v40 = vld [vmem:[#allocation2] sm:$0xff]
    %v41 = vld [vmem:[#allocation2 + $0x8] sm:$0xff]
    %v42 = vld [vmem:[%s1] sm:$0xff]
    %v43 = vld [vmem:[%s1 + $0x8] sm:$0xff]
    %v44 = vld [vmem:[%s1 + $0x10] sm:$0xff]
    %v45 = vld [vmem:[%s1 + $0x18] sm:$0xff]
    %v46 = vld [vmem:[%s1 + $0x20] sm:$0xff]
    %v47 = vld [vmem:[%s1 + $0x28] sm:$0xff]
    %v48 = vld [vmem:[%s1 + $0x30] sm:$0xff]
    %v49 = vld [vmem:[%s1 + $0x38] sm:$0xff]
    %v50 = vld [vmem:[%s1 + $0x40] sm:$0xff]
    %v51 = vld [vmem:[%s1 + $0x48] sm:$0xff]
    %v52 = vld [vmem:[%s1 + $0x50] sm:$0xff]
    %v53 = vld [vmem:[%s1 + $0x58] sm:$0xff]
    %v54 = vld [vmem:[%s1 + $0x60] sm:$0xff]
    %v55 = vld [vmem:[%s1 + $0x68] sm:$0xff]
    %v56 = vld [vmem:[%s1 + $0x70] sm:$0xff]
    %v57 = vld [vmem:[%s1 + $0x78] sm:$0xff]
    %v58 = vld [vmem:[%s2] sm:$0xff]
    %v59 = vld [vmem:[%s2 + $0x8] sm:$0xff]
    %v60 = vld [vmem:[%s2 + $0x10] sm:$0xff]
    %v61 = vld [vmem:[%s2 + $0x18] sm:$0xff]
    %v62 = vld [vmem:[%s2 + $0x20] sm:$0xff]
    %v63 = vld [vmem:[%s2 + $0x28] sm:$0xff]
    %v64 = vld [vmem:[%s2 + $0x30] sm:$0xff]
    %v65 = vld [vmem:[%s2 + $0x38] sm:$0xff]
    %v66 = vld [vmem:[%s2 + $0x40] sm:$0xff]
    %vm67 = vcmask 261120
    %v68 = vsel %vm67, %v40, 0.0
    %69 = vadd.xlane.f32.xlu0 %v68
    %v70 = vpop.xlane.xlu0 %69
    %v71 = vsel %vm67, %v41, 0.0
    %72 = vadd.xlane.f32.xlu0 %v71
    %v73 = vpop.xlane.xlu0 %72
    %v74 = vrcp.pop 32.0
    %v75 = vmul.f32 32.0, %v74
    %v76 = vsub.f32 1.0, %v75
    %v77 = vmul.f32 %v74, %v76
    %v78 = vadd.f32 %v74, %v77
    %vm79 = vweird.f32 %v74
    %v80 = vsel %vm79, %v74, %v78
    %v81 = vmul.f32 %v70, %v80
    %v82 = vmul.f32 %v73, %v80
    %v83 = vsub.f32 %v40, %v81
    %v84 = vsub.f32 %v41, %v82
    %v85 = vmul.f32 %v83, %v83
    %v86 = vmul.f32 %v84, %v84
    %v87 = vsel %vm67, %v85, 0.0
    %88 = vadd.xlane.f32.xlu0 %v87
    %v89 = vpop.xlane.xlu0 %88
    %v90 = vsel %vm67, %v86, 0.0
    %91 = vadd.xlane.f32.xlu0 %v90
    %v92 = vpop.xlane.xlu0 %91
    %v93 = vmul.f32 %v89, %v80
    %v94 = vmul.f32 %v92, %v80
    %v95 = vadd.f32 %v93, 1e-05
    %v96 = vadd.f32 %v94, 1e-05
    %v97 = vrsqrt.pop %v95
    %v98 = vmul.f32 %v97, %v95
    %v99 = vmul.f32 %v98, %v97
    %v100 = vmul.f32 0.5, %v99
    %v101 = vsub.f32 1.5, %v100
    %v102 = vmul.f32 %v97, %v101
    %vm103 = vweird.f32 %v95
    %vm104 = vweird.f32 %v97
    %vm105 = vmor %vm103, %vm104
    %v106 = vsel %vm105, %v97, %v102
    %v107 = vrsqrt.pop %v96
    %v108 = vmul.f32 %v107, %v96
    %v109 = vmul.f32 %v108, %v107
    %v110 = vmul.f32 0.5, %v109
    %v111 = vsub.f32 1.5, %v110
    %v112 = vmul.f32 %v107, %v111
    %vm113 = vweird.f32 %v96
    %vm114 = vweird.f32 %v107
    %vm115 = vmor %vm113, %vm114
    %v116 = vsel %vm115, %v107, %v112
    %v117 = vmul.f32 %v83, %v106
    %v118 = vmul.f32 %v84, %v116
    %v119 = vperm.slane %v66, 0
    %v120 = vmul.f32 %v117, %v119
    %v121 = vmul.f32 %v118, %v119
    %v122 = vperm.slane %v66, 1
    %v123 = vadd.f32 %v120, %v122
    %v124 = vadd.f32 %v121, %v122
    %v126 = vsel %vm67, %v123, 0
    %v129 = vsel %vm67, %v124, 0
    %v132 = vsel %vm67, %v42, 0
    %134 = vmatpush.xpose.msra.mxu0 0.0
    %135 = vmatpush.xpose.msra.mxu0 0.0
    %136 = vmatpush.xpose.msra.mxu0 0.0
    %137 = vmatpush.xpose.msra.mxu0 0.0
    %138 = vmatpush.xpose.msra.mxu0 0.0
    %139 = vmatpush.xpose.msra.mxu0 0.0
    %140 = vmatpush.xpose.msra.mxu0 0.0
    %141 = vmatpush.xpose.msra.mxu0 0.0
    %142 = vmatpush.xpose.msra.mxu0 0.0
    %143 = vmatpush.xpose.msra.mxu0 0.0
    %144 = vmatpush.xpose.msra.mxu0 0.0
    %145 = vmatpush.xpose.msra.mxu0 0.0
    %146 = vmatpush.xpose.msra.mxu0 0.0
    %147 = vmatpush.xpose.msra.mxu0 0.0
    %148 = vmatpush.xpose.msra.mxu0 0.0
    %149 = vmatpush.xpose.msra.mxu0 %v132
    %150 = vmatmul.f32.gmra.mxu0 %v126
    %v151 = vpop.f32.mrf.mxu0
    %v152 = vadd.f32 0.0, %v151
    %153 = vmatmul.f32.gmra.mxu0 %v129
    %v154 = vpop.f32.mrf.mxu0
    %v155 = vadd.f32 0.0, %v154
    %156 = vdwg.mxu0
    %v158 = vsel %vm67, %v43, 0
    %160 = vmatpush.xpose.msra.mxu0 0.0
    %161 = vmatpush.xpose.msra.mxu0 0.0
    %162 = vmatpush.xpose.msra.mxu0 0.0
    %163 = vmatpush.xpose.msra.mxu0 0.0
    %164 = vmatpush.xpose.msra.mxu0 0.0
    %165 = vmatpush.xpose.msra.mxu0 0.0
    %166 = vmatpush.xpose.msra.mxu0 0.0
    %167 = vmatpush.xpose.msra.mxu0 0.0
    %168 = vmatpush.xpose.msra.mxu0 0.0
    %169 = vmatpush.xpose.msra.mxu0 0.0
    %170 = vmatpush.xpose.msra.mxu0 0.0
    %171 = vmatpush.xpose.msra.mxu0 0.0
    %172 = vmatpush.xpose.msra.mxu0 0.0
    %173 = vmatpush.xpose.msra.mxu0 0.0
    %174 = vmatpush.xpose.msra.mxu0 0.0
    %175 = vmatpush.xpose.msra.mxu0 %v158
    %176 = vmatmul.f32.gmra.mxu0 %v126
    %v177 = vpop.f32.mrf.mxu0
    %v178 = vadd.f32 0.0, %v177
    %179 = vmatmul.f32.gmra.mxu0 %v129
    %v180 = vpop.f32.mrf.mxu0
    %v181 = vadd.f32 0.0, %v180
    %182 = vdwg.mxu0
    %v184 = vsel %vm67, %v44, 0
    %186 = vmatpush.xpose.msra.mxu0 0.0
    %187 = vmatpush.xpose.msra.mxu0 0.0
    %188 = vmatpush.xpose.msra.mxu0 0.0
    %189 = vmatpush.xpose.msra.mxu0 0.0
    %190 = vmatpush.xpose.msra.mxu0 0.0
    %191 = vmatpush.xpose.msra.mxu0 0.0
    %192 = vmatpush.xpose.msra.mxu0 0.0
    %193 = vmatpush.xpose.msra.mxu0 0.0
    %194 = vmatpush.xpose.msra.mxu0 0.0
    %195 = vmatpush.xpose.msra.mxu0 0.0
    %196 = vmatpush.xpose.msra.mxu0 0.0
    %197 = vmatpush.xpose.msra.mxu0 0.0
    %198 = vmatpush.xpose.msra.mxu0 0.0
    %199 = vmatpush.xpose.msra.mxu0 0.0
    %200 = vmatpush.xpose.msra.mxu0 0.0
    %201 = vmatpush.xpose.msra.mxu0 %v184
    %202 = vmatmul.f32.gmra.mxu0 %v126
    %v203 = vpop.f32.mrf.mxu0
    %v204 = vadd.f32 0.0, %v203
    %205 = vmatmul.f32.gmra.mxu0 %v129
    %v206 = vpop.f32.mrf.mxu0
    %v207 = vadd.f32 0.0, %v206
    %208 = vdwg.mxu0
    %v210 = vsel %vm67, %v45, 0
    %212 = vmatpush.xpose.msra.mxu0 0.0
    %213 = vmatpush.xpose.msra.mxu0 0.0
    %214 = vmatpush.xpose.msra.mxu0 0.0
    %215 = vmatpush.xpose.msra.mxu0 0.0
    %216 = vmatpush.xpose.msra.mxu0 0.0
    %217 = vmatpush.xpose.msra.mxu0 0.0
    %218 = vmatpush.xpose.msra.mxu0 0.0
    %219 = vmatpush.xpose.msra.mxu0 0.0
    %220 = vmatpush.xpose.msra.mxu0 0.0
    %221 = vmatpush.xpose.msra.mxu0 0.0
    %222 = vmatpush.xpose.msra.mxu0 0.0
    %223 = vmatpush.xpose.msra.mxu0 0.0
    %224 = vmatpush.xpose.msra.mxu0 0.0
    %225 = vmatpush.xpose.msra.mxu0 0.0
    %226 = vmatpush.xpose.msra.mxu0 0.0
    %227 = vmatpush.xpose.msra.mxu0 %v210
    %228 = vmatmul.f32.gmra.mxu0 %v126
    %v229 = vpop.f32.mrf.mxu0
    %v230 = vadd.f32 0.0, %v229
    %231 = vmatmul.f32.gmra.mxu0 %v129
    %v232 = vpop.f32.mrf.mxu0
    %v233 = vadd.f32 0.0, %v232
    %234 = vdwg.mxu0
    %v236 = vsel %vm67, %v46, 0
    %238 = vmatpush.xpose.msra.mxu0 0.0
    %239 = vmatpush.xpose.msra.mxu0 0.0
    %240 = vmatpush.xpose.msra.mxu0 0.0
    %241 = vmatpush.xpose.msra.mxu0 0.0
    %242 = vmatpush.xpose.msra.mxu0 0.0
    %243 = vmatpush.xpose.msra.mxu0 0.0
    %244 = vmatpush.xpose.msra.mxu0 0.0
    %245 = vmatpush.xpose.msra.mxu0 0.0
    %246 = vmatpush.xpose.msra.mxu0 0.0
    %247 = vmatpush.xpose.msra.mxu0 0.0
    %248 = vmatpush.xpose.msra.mxu0 0.0
    %249 = vmatpush.xpose.msra.mxu0 0.0
    %250 = vmatpush.xpose.msra.mxu0 0.0
    %251 = vmatpush.xpose.msra.mxu0 0.0
    %252 = vmatpush.xpose.msra.mxu0 0.0
    %253 = vmatpush.xpose.msra.mxu0 %v236
    %254 = vmatmul.f32.gmra.mxu0 %v126
    %v255 = vpop.f32.mrf.mxu0
    %v256 = vadd.f32 0.0, %v255
    %257 = vmatmul.f32.gmra.mxu0 %v129
    %v258 = vpop.f32.mrf.mxu0
    %v259 = vadd.f32 0.0, %v258
    %260 = vdwg.mxu0
    %v262 = vsel %vm67, %v47, 0
    %264 = vmatpush.xpose.msra.mxu0 0.0
    %265 = vmatpush.xpose.msra.mxu0 0.0
    %266 = vmatpush.xpose.msra.mxu0 0.0
    %267 = vmatpush.xpose.msra.mxu0 0.0
    %268 = vmatpush.xpose.msra.mxu0 0.0
    %269 = vmatpush.xpose.msra.mxu0 0.0
    %270 = vmatpush.xpose.msra.mxu0 0.0
    %271 = vmatpush.xpose.msra.mxu0 0.0
    %272 = vmatpush.xpose.msra.mxu0 0.0
    %273 = vmatpush.xpose.msra.mxu0 0.0
    %274 = vmatpush.xpose.msra.mxu0 0.0
    %275 = vmatpush.xpose.msra.mxu0 0.0
    %276 = vmatpush.xpose.msra.mxu0 0.0
    %277 = vmatpush.xpose.msra.mxu0 0.0
    %278 = vmatpush.xpose.msra.mxu0 0.0
    %279 = vmatpush.xpose.msra.mxu0 %v262
    %280 = vmatmul.f32.gmra.mxu0 %v126
    %v281 = vpop.f32.mrf.mxu0
    %v282 = vadd.f32 0.0, %v281
    %283 = vmatmul.f32.gmra.mxu0 %v129
    %v284 = vpop.f32.mrf.mxu0
    %v285 = vadd.f32 0.0, %v284
    %286 = vdwg.mxu0
    %v288 = vsel %vm67, %v48, 0
    %290 = vmatpush.xpose.msra.mxu0 0.0
    %291 = vmatpush.xpose.msra.mxu0 0.0
    %292 = vmatpush.xpose.msra.mxu0 0.0
    %293 = vmatpush.xpose.msra.mxu0 0.0
    %294 = vmatpush.xpose.msra.mxu0 0.0
    %295 = vmatpush.xpose.msra.mxu0 0.0
    %296 = vmatpush.xpose.msra.mxu0 0.0
    %297 = vmatpush.xpose.msra.mxu0 0.0
    %298 = vmatpush.xpose.msra.mxu0 0.0
    %299 = vmatpush.xpose.msra.mxu0 0.0
    %300 = vmatpush.xpose.msra.mxu0 0.0
    %301 = vmatpush.xpose.msra.mxu0 0.0
    %302 = vmatpush.xpose.msra.mxu0 0.0
    %303 = vmatpush.xpose.msra.mxu0 0.0
    %304 = vmatpush.xpose.msra.mxu0 0.0
    %305 = vmatpush.xpose.msra.mxu0 %v288
    %306 = vmatmul.f32.gmra.mxu0 %v126
    %v307 = vpop.f32.mrf.mxu0
    %v308 = vadd.f32 0.0, %v307
    %309 = vmatmul.f32.gmra.mxu0 %v129
    %v310 = vpop.f32.mrf.mxu0
    %v311 = vadd.f32 0.0, %v310
    %312 = vdwg.mxu0
    %v314 = vsel %vm67, %v49, 0
    %316 = vmatpush.xpose.msra.mxu0 0.0
    %317 = vmatpush.xpose.msra.mxu0 0.0
    %318 = vmatpush.xpose.msra.mxu0 0.0
    %319 = vmatpush.xpose.msra.mxu0 0.0
    %320 = vmatpush.xpose.msra.mxu0 0.0
    %321 = vmatpush.xpose.msra.mxu0 0.0
    %322 = vmatpush.xpose.msra.mxu0 0.0
    %323 = vmatpush.xpose.msra.mxu0 0.0
    %324 = vmatpush.xpose.msra.mxu0 0.0
    %325 = vmatpush.xpose.msra.mxu0 0.0
    %326 = vmatpush.xpose.msra.mxu0 0.0
    %327 = vmatpush.xpose.msra.mxu0 0.0
    %328 = vmatpush.xpose.msra.mxu0 0.0
    %329 = vmatpush.xpose.msra.mxu0 0.0
    %330 = vmatpush.xpose.msra.mxu0 0.0
    %331 = vmatpush.xpose.msra.mxu0 %v314
    %332 = vmatmul.f32.gmra.mxu0 %v126
    %v333 = vpop.f32.mrf.mxu0
    %v334 = vadd.f32 0.0, %v333
    %335 = vmatmul.f32.gmra.mxu0 %v129
    %v336 = vpop.f32.mrf.mxu0
    %v337 = vadd.f32 0.0, %v336
    %338 = vdwg.mxu0
    %v340 = vsel %vm67, %v50, 0
    %342 = vmatpush.xpose.msra.mxu0 0.0
    %343 = vmatpush.xpose.msra.mxu0 0.0
    %344 = vmatpush.xpose.msra.mxu0 0.0
    %345 = vmatpush.xpose.msra.mxu0 0.0
    %346 = vmatpush.xpose.msra.mxu0 0.0
    %347 = vmatpush.xpose.msra.mxu0 0.0
    %348 = vmatpush.xpose.msra.mxu0 0.0
    %349 = vmatpush.xpose.msra.mxu0 0.0
    %350 = vmatpush.xpose.msra.mxu0 0.0
    %351 = vmatpush.xpose.msra.mxu0 0.0
    %352 = vmatpush.xpose.msra.mxu0 0.0
    %353 = vmatpush.xpose.msra.mxu0 0.0
    %354 = vmatpush.xpose.msra.mxu0 0.0
    %355 = vmatpush.xpose.msra.mxu0 0.0
    %356 = vmatpush.xpose.msra.mxu0 0.0
    %357 = vmatpush.xpose.msra.mxu0 %v340
    %358 = vmatmul.f32.gmra.mxu0 %v126
    %v359 = vpop.f32.mrf.mxu0
    %v360 = vadd.f32 0.0, %v359
    %361 = vmatmul.f32.gmra.mxu0 %v129
    %v362 = vpop.f32.mrf.mxu0
    %v363 = vadd.f32 0.0, %v362
    %364 = vdwg.mxu0
    %v366 = vsel %vm67, %v51, 0
    %368 = vmatpush.xpose.msra.mxu0 0.0
    %369 = vmatpush.xpose.msra.mxu0 0.0
    %370 = vmatpush.xpose.msra.mxu0 0.0
    %371 = vmatpush.xpose.msra.mxu0 0.0
    %372 = vmatpush.xpose.msra.mxu0 0.0
    %373 = vmatpush.xpose.msra.mxu0 0.0
    %374 = vmatpush.xpose.msra.mxu0 0.0
    %375 = vmatpush.xpose.msra.mxu0 0.0
    %376 = vmatpush.xpose.msra.mxu0 0.0
    %377 = vmatpush.xpose.msra.mxu0 0.0
    %378 = vmatpush.xpose.msra.mxu0 0.0
    %379 = vmatpush.xpose.msra.mxu0 0.0
    %380 = vmatpush.xpose.msra.mxu0 0.0
    %381 = vmatpush.xpose.msra.mxu0 0.0
    %382 = vmatpush.xpose.msra.mxu0 0.0
    %383 = vmatpush.xpose.msra.mxu0 %v366
    %384 = vmatmul.f32.gmra.mxu0 %v126
    %v385 = vpop.f32.mrf.mxu0
    %v386 = vadd.f32 0.0, %v385
    %387 = vmatmul.f32.gmra.mxu0 %v129
    %v388 = vpop.f32.mrf.mxu0
    %v389 = vadd.f32 0.0, %v388
    %390 = vdwg.mxu0
    %v392 = vsel %vm67, %v52, 0
    %394 = vmatpush.xpose.msra.mxu0 0.0
    %395 = vmatpush.xpose.msra.mxu0 0.0
    %396 = vmatpush.xpose.msra.mxu0 0.0
    %397 = vmatpush.xpose.msra.mxu0 0.0
    %398 = vmatpush.xpose.msra.mxu0 0.0
    %399 = vmatpush.xpose.msra.mxu0 0.0
    %400 = vmatpush.xpose.msra.mxu0 0.0
    %401 = vmatpush.xpose.msra.mxu0 0.0
    %402 = vmatpush.xpose.msra.mxu0 0.0
    %403 = vmatpush.xpose.msra.mxu0 0.0
    %404 = vmatpush.xpose.msra.mxu0 0.0
    %405 = vmatpush.xpose.msra.mxu0 0.0
    %406 = vmatpush.xpose.msra.mxu0 0.0
    %407 = vmatpush.xpose.msra.mxu0 0.0
    %408 = vmatpush.xpose.msra.mxu0 0.0
    %409 = vmatpush.xpose.msra.mxu0 %v392
    %410 = vmatmul.f32.gmra.mxu0 %v126
    %v411 = vpop.f32.mrf.mxu0
    %v412 = vadd.f32 0.0, %v411
    %413 = vmatmul.f32.gmra.mxu0 %v129
    %v414 = vpop.f32.mrf.mxu0
    %v415 = vadd.f32 0.0, %v414
    %416 = vdwg.mxu0
    %v418 = vsel %vm67, %v53, 0
    %420 = vmatpush.xpose.msra.mxu0 0.0
    %421 = vmatpush.xpose.msra.mxu0 0.0
    %422 = vmatpush.xpose.msra.mxu0 0.0
    %423 = vmatpush.xpose.msra.mxu0 0.0
    %424 = vmatpush.xpose.msra.mxu0 0.0
    %425 = vmatpush.xpose.msra.mxu0 0.0
    %426 = vmatpush.xpose.msra.mxu0 0.0
    %427 = vmatpush.xpose.msra.mxu0 0.0
    %428 = vmatpush.xpose.msra.mxu0 0.0
    %429 = vmatpush.xpose.msra.mxu0 0.0
    %430 = vmatpush.xpose.msra.mxu0 0.0
    %431 = vmatpush.xpose.msra.mxu0 0.0
    %432 = vmatpush.xpose.msra.mxu0 0.0
    %433 = vmatpush.xpose.msra.mxu0 0.0
    %434 = vmatpush.xpose.msra.mxu0 0.0
    %435 = vmatpush.xpose.msra.mxu0 %v418
    %436 = vmatmul.f32.gmra.mxu0 %v126
    %v437 = vpop.f32.mrf.mxu0
    %v438 = vadd.f32 0.0, %v437
    %439 = vmatmul.f32.gmra.mxu0 %v129
    %v440 = vpop.f32.mrf.mxu0
    %v441 = vadd.f32 0.0, %v440
    %442 = vdwg.mxu0
    %vm443 = vcmask 64512
    %v445 = vsel %vm443, %v152, 0
    %v448 = vsel %vm443, %v256, 0
    %450 = vmatpush.xpose.msra.mxu0 0.0
    %451 = vmatpush.xpose.msra.mxu0 0.0
    %452 = vmatpush.xpose.msra.mxu0 0.0
    %453 = vmatpush.xpose.msra.mxu0 0.0
    %454 = vmatpush.xpose.msra.mxu0 0.0
    %455 = vmatpush.xpose.msra.mxu0 0.0
    %456 = vmatpush.xpose.msra.mxu0 0.0
    %457 = vmatpush.xpose.msra.mxu0 0.0
    %458 = vmatpush.xpose.msra.mxu0 0.0
    %459 = vmatpush.xpose.msra.mxu0 0.0
    %460 = vmatpush.xpose.msra.mxu0 0.0
    %461 = vmatpush.xpose.msra.mxu0 0.0
    %462 = vmatpush.xpose.msra.mxu0 0.0
    %463 = vmatpush.xpose.msra.mxu0 0.0
    %464 = vmatpush.xpose.msra.mxu0 0.0
    %465 = vmatpush.xpose.msra.mxu0 %v448
    %466 = vmatmul.f32.gmra.mxu0 %v445
    %v467 = vpop.f32.mrf.mxu0
    %v468 = vadd.f32 0.0, %v467
    %469 = vdwg.mxu0
    %v471 = vsel %vm443, %v155, 0
    %v474 = vsel %vm443, %v259, 0
    %476 = vmatpush.xpose.msra.mxu0 0.0
    %477 = vmatpush.xpose.msra.mxu0 0.0
    %478 = vmatpush.xpose.msra.mxu0 0.0
    %479 = vmatpush.xpose.msra.mxu0 0.0
    %480 = vmatpush.xpose.msra.mxu0 0.0
    %481 = vmatpush.xpose.msra.mxu0 0.0
    %482 = vmatpush.xpose.msra.mxu0 0.0
    %483 = vmatpush.xpose.msra.mxu0 0.0
    %484 = vmatpush.xpose.msra.mxu0 0.0
    %485 = vmatpush.xpose.msra.mxu0 0.0
    %486 = vmatpush.xpose.msra.mxu0 0.0
    %487 = vmatpush.xpose.msra.mxu0 0.0
    %488 = vmatpush.xpose.msra.mxu0 0.0
    %489 = vmatpush.xpose.msra.mxu0 0.0
    %490 = vmatpush.xpose.msra.mxu0 0.0
    %491 = vmatpush.xpose.msra.mxu0 %v474
    %492 = vmatmul.f32.gmra.mxu0 %v471
    %v493 = vpop.f32.mrf.mxu0
    %v494 = vadd.f32 0.0, %v493
    %495 = vdwg.mxu0
    %v497 = vsel %vm443, %v178, 0
    %v500 = vsel %vm443, %v282, 0
    %502 = vmatpush.xpose.msra.mxu0 0.0
    %503 = vmatpush.xpose.msra.mxu0 0.0
    %504 = vmatpush.xpose.msra.mxu0 0.0
    %505 = vmatpush.xpose.msra.mxu0 0.0
    %506 = vmatpush.xpose.msra.mxu0 0.0
    %507 = vmatpush.xpose.msra.mxu0 0.0
    %508 = vmatpush.xpose.msra.mxu0 0.0
    %509 = vmatpush.xpose.msra.mxu0 0.0
    %510 = vmatpush.xpose.msra.mxu0 0.0
    %511 = vmatpush.xpose.msra.mxu0 0.0
    %512 = vmatpush.xpose.msra.mxu0 0.0
    %513 = vmatpush.xpose.msra.mxu0 0.0
    %514 = vmatpush.xpose.msra.mxu0 0.0
    %515 = vmatpush.xpose.msra.mxu0 0.0
    %516 = vmatpush.xpose.msra.mxu0 0.0
    %517 = vmatpush.xpose.msra.mxu0 %v500
    %518 = vmatmul.f32.gmra.mxu0 %v497
    %v519 = vpop.f32.mrf.mxu0
    %v520 = vadd.f32 0.0, %v519
    %521 = vdwg.mxu0
    %v523 = vsel %vm443, %v181, 0
    %v526 = vsel %vm443, %v285, 0
    %528 = vmatpush.xpose.msra.mxu0 0.0
    %529 = vmatpush.xpose.msra.mxu0 0.0
    %530 = vmatpush.xpose.msra.mxu0 0.0
    %531 = vmatpush.xpose.msra.mxu0 0.0
    %532 = vmatpush.xpose.msra.mxu0 0.0
    %533 = vmatpush.xpose.msra.mxu0 0.0
    %534 = vmatpush.xpose.msra.mxu0 0.0
    %535 = vmatpush.xpose.msra.mxu0 0.0
    %536 = vmatpush.xpose.msra.mxu0 0.0
    %537 = vmatpush.xpose.msra.mxu0 0.0
    %538 = vmatpush.xpose.msra.mxu0 0.0
    %539 = vmatpush.xpose.msra.mxu0 0.0
    %540 = vmatpush.xpose.msra.mxu0 0.0
    %541 = vmatpush.xpose.msra.mxu0 0.0
    %542 = vmatpush.xpose.msra.mxu0 0.0
    %543 = vmatpush.xpose.msra.mxu0 %v526
    %544 = vmatmul.f32.gmra.mxu0 %v523
    %v545 = vpop.f32.mrf.mxu0
    %v546 = vadd.f32 0.0, %v545
    %547 = vdwg.mxu0
    %v549 = vsel %vm443, %v204, 0
    %v552 = vsel %vm443, %v308, 0
    %554 = vmatpush.xpose.msra.mxu0 0.0
    %555 = vmatpush.xpose.msra.mxu0 0.0
    %556 = vmatpush.xpose.msra.mxu0 0.0
    %557 = vmatpush.xpose.msra.mxu0 0.0
    %558 = vmatpush.xpose.msra.mxu0 0.0
    %559 = vmatpush.xpose.msra.mxu0 0.0
    %560 = vmatpush.xpose.msra.mxu0 0.0
    %561 = vmatpush.xpose.msra.mxu0 0.0
    %562 = vmatpush.xpose.msra.mxu0 0.0
    %563 = vmatpush.xpose.msra.mxu0 0.0
    %564 = vmatpush.xpose.msra.mxu0 0.0
    %565 = vmatpush.xpose.msra.mxu0 0.0
    %566 = vmatpush.xpose.msra.mxu0 0.0
    %567 = vmatpush.xpose.msra.mxu0 0.0
    %568 = vmatpush.xpose.msra.mxu0 0.0
    %569 = vmatpush.xpose.msra.mxu0 %v552
    %570 = vmatmul.f32.gmra.mxu0 %v549
    %v571 = vpop.f32.mrf.mxu0
    %v572 = vadd.f32 0.0, %v571
    %573 = vdwg.mxu0
    %v575 = vsel %vm443, %v207, 0
    %v578 = vsel %vm443, %v311, 0
    %580 = vmatpush.xpose.msra.mxu0 0.0
    %581 = vmatpush.xpose.msra.mxu0 0.0
    %582 = vmatpush.xpose.msra.mxu0 0.0
    %583 = vmatpush.xpose.msra.mxu0 0.0
    %584 = vmatpush.xpose.msra.mxu0 0.0
    %585 = vmatpush.xpose.msra.mxu0 0.0
    %586 = vmatpush.xpose.msra.mxu0 0.0
    %587 = vmatpush.xpose.msra.mxu0 0.0
    %588 = vmatpush.xpose.msra.mxu0 0.0
    %589 = vmatpush.xpose.msra.mxu0 0.0
    %590 = vmatpush.xpose.msra.mxu0 0.0
    %591 = vmatpush.xpose.msra.mxu0 0.0
    %592 = vmatpush.xpose.msra.mxu0 0.0
    %593 = vmatpush.xpose.msra.mxu0 0.0
    %594 = vmatpush.xpose.msra.mxu0 0.0
    %595 = vmatpush.xpose.msra.mxu0 %v578
    %596 = vmatmul.f32.gmra.mxu0 %v575
    %v597 = vpop.f32.mrf.mxu0
    %v598 = vadd.f32 0.0, %v597
    %599 = vdwg.mxu0
    %v601 = vsel %vm443, %v230, 0
    %v604 = vsel %vm443, %v334, 0
    %606 = vmatpush.xpose.msra.mxu0 0.0
    %607 = vmatpush.xpose.msra.mxu0 0.0
    %608 = vmatpush.xpose.msra.mxu0 0.0
    %609 = vmatpush.xpose.msra.mxu0 0.0
    %610 = vmatpush.xpose.msra.mxu0 0.0
    %611 = vmatpush.xpose.msra.mxu0 0.0
    %612 = vmatpush.xpose.msra.mxu0 0.0
    %613 = vmatpush.xpose.msra.mxu0 0.0
    %614 = vmatpush.xpose.msra.mxu0 0.0
    %615 = vmatpush.xpose.msra.mxu0 0.0
    %616 = vmatpush.xpose.msra.mxu0 0.0
    %617 = vmatpush.xpose.msra.mxu0 0.0
    %618 = vmatpush.xpose.msra.mxu0 0.0
    %619 = vmatpush.xpose.msra.mxu0 0.0
    %620 = vmatpush.xpose.msra.mxu0 0.0
    %621 = vmatpush.xpose.msra.mxu0 %v604
    %622 = vmatmul.f32.gmra.mxu0 %v601
    %v623 = vpop.f32.mrf.mxu0
    %v624 = vadd.f32 0.0, %v623
    %625 = vdwg.mxu0
    %v627 = vsel %vm443, %v233, 0
    %v630 = vsel %vm443, %v337, 0
    %632 = vmatpush.xpose.msra.mxu0 0.0
    %633 = vmatpush.xpose.msra.mxu0 0.0
    %634 = vmatpush.xpose.msra.mxu0 0.0
    %635 = vmatpush.xpose.msra.mxu0 0.0
    %636 = vmatpush.xpose.msra.mxu0 0.0
    %637 = vmatpush.xpose.msra.mxu0 0.0
    %638 = vmatpush.xpose.msra.mxu0 0.0
    %639 = vmatpush.xpose.msra.mxu0 0.0
    %640 = vmatpush.xpose.msra.mxu0 0.0
    %641 = vmatpush.xpose.msra.mxu0 0.0
    %642 = vmatpush.xpose.msra.mxu0 0.0
    %643 = vmatpush.xpose.msra.mxu0 0.0
    %644 = vmatpush.xpose.msra.mxu0 0.0
    %645 = vmatpush.xpose.msra.mxu0 0.0
    %646 = vmatpush.xpose.msra.mxu0 0.0
    %647 = vmatpush.xpose.msra.mxu0 %v630
    %648 = vmatmul.f32.gmra.mxu0 %v627
    %v649 = vpop.f32.mrf.mxu0
    %v650 = vadd.f32 0.0, %v649
    %651 = vdwg.mxu0
    %v652 = vmul.f32 %v468, 0.35355338
    %v653 = vmul.f32 %v494, 0.35355338
    %v654 = vmul.f32 %v520, 0.35355338
    %v655 = vmul.f32 %v546, 0.35355338
    %v656 = vmul.f32 %v572, 0.35355338
    %v657 = vmul.f32 %v598, 0.35355338
    %v658 = vmul.f32 %v624, 0.35355338
    %v659 = vmul.f32 %v650, 0.35355338
    %v660 = vsel %vm443, %v652, -inf
    %661 = vmax.xlane.f32.xlu0 %v660
    %v662 = vpop.xlane.xlu0 %661
    %v663 = vsel %vm443, %v653, -inf
    %664 = vmax.xlane.f32.xlu0 %v663
    %v665 = vpop.xlane.xlu0 %664
    %v666 = vsel %vm443, %v654, -inf
    %667 = vmax.xlane.f32.xlu0 %v666
    %v668 = vpop.xlane.xlu0 %667
    %v669 = vsel %vm443, %v655, -inf
    %670 = vmax.xlane.f32.xlu0 %v669
    %v671 = vpop.xlane.xlu0 %670
    %v672 = vsel %vm443, %v656, -inf
    %673 = vmax.xlane.f32.xlu0 %v672
    %v674 = vpop.xlane.xlu0 %673
    %v675 = vsel %vm443, %v657, -inf
    %676 = vmax.xlane.f32.xlu0 %v675
    %v677 = vpop.xlane.xlu0 %676
    %v678 = vsel %vm443, %v658, -inf
    %679 = vmax.xlane.f32.xlu0 %v678
    %v680 = vpop.xlane.xlu0 %679
    %v681 = vsel %vm443, %v659, -inf
    %682 = vmax.xlane.f32.xlu0 %v681
    %v683 = vpop.xlane.xlu0 %682
    %v684 = vsub.f32 %v652, %v662
    %v685 = vsub.f32 %v653, %v665
    %v686 = vsub.f32 %v654, %v668
    %v687 = vsub.f32 %v655, %v671
    %v688 = vsub.f32 %v656, %v674
    %v689 = vsub.f32 %v657, %v677
    %v690 = vsub.f32 %v658, %v680
    %v691 = vsub.f32 %v659, %v683
    %v692 = vmul.f32 %v684, 1.442695
    %v693 = vpow.pop %v692
    %v694 = vmul.f32 %v685, 1.442695
    %v695 = vpow.pop %v694
    %v696 = vmul.f32 %v686, 1.442695
    %v697 = vpow.pop %v696
    %v698 = vmul.f32 %v687, 1.442695
    %v699 = vpow.pop %v698
    %v700 = vmul.f32 %v688, 1.442695
    %v701 = vpow.pop %v700
    %v702 = vmul.f32 %v689, 1.442695
    %v703 = vpow.pop %v702
    %v704 = vmul.f32 %v690, 1.442695
    %v705 = vpow.pop %v704
    %v706 = vmul.f32 %v691, 1.442695
    %v707 = vpow.pop %v706
    %v708 = vsel %vm443, %v693, 0.0
    %709 = vadd.xlane.f32.xlu0 %v708
    %v710 = vpop.xlane.xlu0 %709
    %v711 = vsel %vm443, %v695, 0.0
    %712 = vadd.xlane.f32.xlu0 %v711
    %v713 = vpop.xlane.xlu0 %712
    %v714 = vsel %vm443, %v697, 0.0
    %715 = vadd.xlane.f32.xlu0 %v714
    %v716 = vpop.xlane.xlu0 %715
    %v717 = vsel %vm443, %v699, 0.0
    %718 = vadd.xlane.f32.xlu0 %v717
    %v719 = vpop.xlane.xlu0 %718
    %v720 = vsel %vm443, %v701, 0.0
    %721 = vadd.xlane.f32.xlu0 %v720
    %v722 = vpop.xlane.xlu0 %721
    %v723 = vsel %vm443, %v703, 0.0
    %724 = vadd.xlane.f32.xlu0 %v723
    %v725 = vpop.xlane.xlu0 %724
    %v726 = vsel %vm443, %v705, 0.0
    %727 = vadd.xlane.f32.xlu0 %v726
    %v728 = vpop.xlane.xlu0 %727
    %v729 = vsel %vm443, %v707, 0.0
    %730 = vadd.xlane.f32.xlu0 %v729
    %v731 = vpop.xlane.xlu0 %730
    %v732 = vrcp.pop %v710
    %v733 = vmul.f32 %v710, %v732
    %v734 = vsub.f32 1.0, %v733
    %v735 = vmul.f32 %v732, %v734
    %v736 = vadd.f32 %v732, %v735
    %vm737 = vweird.f32 %v710
    %vm738 = vweird.f32 %v732
    %vm739 = vmor %vm737, %vm738
    %v740 = vsel %vm739, %v732, %v736
    %v741 = vand.u32 2147483647, %v710
    %vm742 = vcmp.eq.f32.partialorder %v741, 8.507059e+37
    %v743 = vand.u32 %v710, 2147483648
    %v744 = vor.u32 1.1754944e-38, %v743
    %v745 = vsel %vm742, %v744, %v740
    %v746 = vrcp.pop %v713
    %v747 = vmul.f32 %v713, %v746
    %v748 = vsub.f32 1.0, %v747
    %v749 = vmul.f32 %v746, %v748
    %v750 = vadd.f32 %v746, %v749
    %vm751 = vweird.f32 %v713
    %vm752 = vweird.f32 %v746
    %vm753 = vmor %vm751, %vm752
    %v754 = vsel %vm753, %v746, %v750
    %v755 = vand.u32 2147483647, %v713
    %vm756 = vcmp.eq.f32.partialorder %v755, 8.507059e+37
    %v757 = vand.u32 %v713, 2147483648
    %v758 = vor.u32 1.1754944e-38, %v757
    %v759 = vsel %vm756, %v758, %v754
    %v760 = vrcp.pop %v716
    %v761 = vmul.f32 %v716, %v760
    %v762 = vsub.f32 1.0, %v761
    %v763 = vmul.f32 %v760, %v762
    %v764 = vadd.f32 %v760, %v763
    %vm765 = vweird.f32 %v716
    %vm766 = vweird.f32 %v760
    %vm767 = vmor %vm765, %vm766
    %v768 = vsel %vm767, %v760, %v764
    %v769 = vand.u32 2147483647, %v716
    %vm770 = vcmp.eq.f32.partialorder %v769, 8.507059e+37
    %v771 = vand.u32 %v716, 2147483648
    %v772 = vor.u32 1.1754944e-38, %v771
    %v773 = vsel %vm770, %v772, %v768
    %v774 = vrcp.pop %v719
    %v775 = vmul.f32 %v719, %v774
    %v776 = vsub.f32 1.0, %v775
    %v777 = vmul.f32 %v774, %v776
    %v778 = vadd.f32 %v774, %v777
    %vm779 = vweird.f32 %v719
    %vm780 = vweird.f32 %v774
    %vm781 = vmor %vm779, %vm780
    %v782 = vsel %vm781, %v774, %v778
    %v783 = vand.u32 2147483647, %v719
    %vm784 = vcmp.eq.f32.partialorder %v783, 8.507059e+37
    %v785 = vand.u32 %v719, 2147483648
    %v786 = vor.u32 1.1754944e-38, %v785
    %v787 = vsel %vm784, %v786, %v782
    %v788 = vrcp.pop %v722
    %v789 = vmul.f32 %v722, %v788
    %v790 = vsub.f32 1.0, %v789
    %v791 = vmul.f32 %v788, %v790
    %v792 = vadd.f32 %v788, %v791
    %vm793 = vweird.f32 %v722
    %vm794 = vweird.f32 %v788
    %vm795 = vmor %vm793, %vm794
    %v796 = vsel %vm795, %v788, %v792
    %v797 = vand.u32 2147483647, %v722
    %vm798 = vcmp.eq.f32.partialorder %v797, 8.507059e+37
    %v799 = vand.u32 %v722, 2147483648
    %v800 = vor.u32 1.1754944e-38, %v799
    %v801 = vsel %vm798, %v800, %v796
    %v802 = vrcp.pop %v725
    %v803 = vmul.f32 %v725, %v802
    %v804 = vsub.f32 1.0, %v803
    %v805 = vmul.f32 %v802, %v804
    %v806 = vadd.f32 %v802, %v805
    %vm807 = vweird.f32 %v725
    %vm808 = vweird.f32 %v802
    %vm809 = vmor %vm807, %vm808
    %v810 = vsel %vm809, %v802, %v806
    %v811 = vand.u32 2147483647, %v725
    %vm812 = vcmp.eq.f32.partialorder %v811, 8.507059e+37
    %v813 = vand.u32 %v725, 2147483648
    %v814 = vor.u32 1.1754944e-38, %v813
    %v815 = vsel %vm812, %v814, %v810
    %v816 = vrcp.pop %v728
    %v817 = vmul.f32 %v728, %v816
    %v818 = vsub.f32 1.0, %v817
    %v819 = vmul.f32 %v816, %v818
    %v820 = vadd.f32 %v816, %v819
    %vm821 = vweird.f32 %v728
    %vm822 = vweird.f32 %v816
    %vm823 = vmor %vm821, %vm822
    %v824 = vsel %vm823, %v816, %v820
    %v825 = vand.u32 2147483647, %v728
    %vm826 = vcmp.eq.f32.partialorder %v825, 8.507059e+37
    %v827 = vand.u32 %v728, 2147483648
    %v828 = vor.u32 1.1754944e-38, %v827
    %v829 = vsel %vm826, %v828, %v824
    %v830 = vrcp.pop %v731
    %v831 = vmul.f32 %v731, %v830
    %v832 = vsub.f32 1.0, %v831
    %v833 = vmul.f32 %v830, %v832
    %v834 = vadd.f32 %v830, %v833
    %vm835 = vweird.f32 %v731
    %vm836 = vweird.f32 %v830
    %vm837 = vmor %vm835, %vm836
    %v838 = vsel %vm837, %v830, %v834
    %v839 = vand.u32 2147483647, %v731
    %vm840 = vcmp.eq.f32.partialorder %v839, 8.507059e+37
    %v841 = vand.u32 %v731, 2147483648
    %v842 = vor.u32 1.1754944e-38, %v841
    %v843 = vsel %vm840, %v842, %v838
    %v844 = vmul.f32 %v693, %v745
    %v845 = vmul.f32 %v695, %v759
    %v846 = vmul.f32 %v697, %v773
    %v847 = vmul.f32 %v699, %v787
    %v848 = vmul.f32 %v701, %v801
    %v849 = vmul.f32 %v703, %v815
    %v850 = vmul.f32 %v705, %v829
    %v851 = vmul.f32 %v707, %v843
    %v853 = vsel %vm443, %v844, 0
    %855 = vmatpush.msra.mxu0 0.0
    %856 = vmatpush.msra.mxu0 0.0
    %857 = vmatpush.msra.mxu0 0.0
    %858 = vmatpush.msra.mxu0 0.0
    %859 = vmatpush.msra.mxu0 0.0
    %860 = vmatpush.msra.mxu0 0.0
    %861 = vmatpush.msra.mxu0 0.0
    %862 = vmatpush.msra.mxu0 0.0
    %863 = vmatpush.msra.mxu0 0.0
    %864 = vmatpush.msra.mxu0 0.0
    %865 = vmatpush.msra.mxu0 0.0
    %866 = vmatpush.msra.mxu0 0.0
    %867 = vmatpush.msra.mxu0 0.0
    %868 = vmatpush.msra.mxu0 0.0
    %869 = vmatpush.msra.mxu0 0.0
    %870 = vmatpush.msra.mxu0 %v360
    %871 = vmatmul.f32.gmra.mxu0 %v853
    %v872 = vpop.f32.mrf.mxu0
    %v873 = vadd.f32 0.0, %v872
    %874 = vdwg.mxu0
    %v876 = vsel %vm443, %v845, 0
    %878 = vmatpush.msra.mxu0 0.0
    %879 = vmatpush.msra.mxu0 0.0
    %880 = vmatpush.msra.mxu0 0.0
    %881 = vmatpush.msra.mxu0 0.0
    %882 = vmatpush.msra.mxu0 0.0
    %883 = vmatpush.msra.mxu0 0.0
    %884 = vmatpush.msra.mxu0 0.0
    %885 = vmatpush.msra.mxu0 0.0
    %886 = vmatpush.msra.mxu0 0.0
    %887 = vmatpush.msra.mxu0 0.0
    %888 = vmatpush.msra.mxu0 0.0
    %889 = vmatpush.msra.mxu0 0.0
    %890 = vmatpush.msra.mxu0 0.0
    %891 = vmatpush.msra.mxu0 0.0
    %892 = vmatpush.msra.mxu0 0.0
    %893 = vmatpush.msra.mxu0 %v363
    %894 = vmatmul.f32.gmra.mxu0 %v876
    %v895 = vpop.f32.mrf.mxu0
    %v896 = vadd.f32 0.0, %v895
    %897 = vdwg.mxu0
    %v899 = vsel %vm443, %v846, 0
    %901 = vmatpush.msra.mxu0 0.0
    %902 = vmatpush.msra.mxu0 0.0
    %903 = vmatpush.msra.mxu0 0.0
    %904 = vmatpush.msra.mxu0 0.0
    %905 = vmatpush.msra.mxu0 0.0
    %906 = vmatpush.msra.mxu0 0.0
    %907 = vmatpush.msra.mxu0 0.0
    %908 = vmatpush.msra.mxu0 0.0
    %909 = vmatpush.msra.mxu0 0.0
    %910 = vmatpush.msra.mxu0 0.0
    %911 = vmatpush.msra.mxu0 0.0
    %912 = vmatpush.msra.mxu0 0.0
    %913 = vmatpush.msra.mxu0 0.0
    %914 = vmatpush.msra.mxu0 0.0
    %915 = vmatpush.msra.mxu0 0.0
    %916 = vmatpush.msra.mxu0 %v386
    %917 = vmatmul.f32.gmra.mxu0 %v899
    %v918 = vpop.f32.mrf.mxu0
    %v919 = vadd.f32 0.0, %v918
    %920 = vdwg.mxu0
    %v922 = vsel %vm443, %v847, 0
    %924 = vmatpush.msra.mxu0 0.0
    %925 = vmatpush.msra.mxu0 0.0
    %926 = vmatpush.msra.mxu0 0.0
    %927 = vmatpush.msra.mxu0 0.0
    %928 = vmatpush.msra.mxu0 0.0
    %929 = vmatpush.msra.mxu0 0.0
    %930 = vmatpush.msra.mxu0 0.0
    %931 = vmatpush.msra.mxu0 0.0
    %932 = vmatpush.msra.mxu0 0.0
    %933 = vmatpush.msra.mxu0 0.0
    %934 = vmatpush.msra.mxu0 0.0
    %935 = vmatpush.msra.mxu0 0.0
    %936 = vmatpush.msra.mxu0 0.0
    %937 = vmatpush.msra.mxu0 0.0
    %938 = vmatpush.msra.mxu0 0.0
    %939 = vmatpush.msra.mxu0 %v389
    %940 = vmatmul.f32.gmra.mxu0 %v922
    %v941 = vpop.f32.mrf.mxu0
    %v942 = vadd.f32 0.0, %v941
    %943 = vdwg.mxu0
    %v945 = vsel %vm443, %v848, 0
    %947 = vmatpush.msra.mxu0 0.0
    %948 = vmatpush.msra.mxu0 0.0
    %949 = vmatpush.msra.mxu0 0.0
    %950 = vmatpush.msra.mxu0 0.0
    %951 = vmatpush.msra.mxu0 0.0
    %952 = vmatpush.msra.mxu0 0.0
    %953 = vmatpush.msra.mxu0 0.0
    %954 = vmatpush.msra.mxu0 0.0
    %955 = vmatpush.msra.mxu0 0.0
    %956 = vmatpush.msra.mxu0 0.0
    %957 = vmatpush.msra.mxu0 0.0
    %958 = vmatpush.msra.mxu0 0.0
    %959 = vmatpush.msra.mxu0 0.0
    %960 = vmatpush.msra.mxu0 0.0
    %961 = vmatpush.msra.mxu0 0.0
    %962 = vmatpush.msra.mxu0 %v412
    %963 = vmatmul.f32.gmra.mxu0 %v945
    %v964 = vpop.f32.mrf.mxu0
    %v965 = vadd.f32 0.0, %v964
    %966 = vdwg.mxu0
    %v968 = vsel %vm443, %v849, 0
    %970 = vmatpush.msra.mxu0 0.0
    %971 = vmatpush.msra.mxu0 0.0
    %972 = vmatpush.msra.mxu0 0.0
    %973 = vmatpush.msra.mxu0 0.0
    %974 = vmatpush.msra.mxu0 0.0
    %975 = vmatpush.msra.mxu0 0.0
    %976 = vmatpush.msra.mxu0 0.0
    %977 = vmatpush.msra.mxu0 0.0
    %978 = vmatpush.msra.mxu0 0.0
    %979 = vmatpush.msra.mxu0 0.0
    %980 = vmatpush.msra.mxu0 0.0
    %981 = vmatpush.msra.mxu0 0.0
    %982 = vmatpush.msra.mxu0 0.0
    %983 = vmatpush.msra.mxu0 0.0
    %984 = vmatpush.msra.mxu0 0.0
    %985 = vmatpush.msra.mxu0 %v415
    %986 = vmatmul.f32.gmra.mxu0 %v968
    %v987 = vpop.f32.mrf.mxu0
    %v988 = vadd.f32 0.0, %v987
    %989 = vdwg.mxu0
    %v991 = vsel %vm443, %v850, 0
    %993 = vmatpush.msra.mxu0 0.0
    %994 = vmatpush.msra.mxu0 0.0
    %995 = vmatpush.msra.mxu0 0.0
    %996 = vmatpush.msra.mxu0 0.0
    %997 = vmatpush.msra.mxu0 0.0
    %998 = vmatpush.msra.mxu0 0.0
    %999 = vmatpush.msra.mxu0 0.0
    %1000 = vmatpush.msra.mxu0 0.0
    %1001 = vmatpush.msra.mxu0 0.0
    %1002 = vmatpush.msra.mxu0 0.0
    %1003 = vmatpush.msra.mxu0 0.0
    %1004 = vmatpush.msra.mxu0 0.0
    %1005 = vmatpush.msra.mxu0 0.0
    %1006 = vmatpush.msra.mxu0 0.0
    %1007 = vmatpush.msra.mxu0 0.0
    %1008 = vmatpush.msra.mxu0 %v438
    %1009 = vmatmul.f32.gmra.mxu0 %v991
    %v1010 = vpop.f32.mrf.mxu0
    %v1011 = vadd.f32 0.0, %v1010
    %1012 = vdwg.mxu0
    %v1014 = vsel %vm443, %v851, 0
    %1016 = vmatpush.msra.mxu0 0.0
    %1017 = vmatpush.msra.mxu0 0.0
    %1018 = vmatpush.msra.mxu0 0.0
    %1019 = vmatpush.msra.mxu0 0.0
    %1020 = vmatpush.msra.mxu0 0.0
    %1021 = vmatpush.msra.mxu0 0.0
    %1022 = vmatpush.msra.mxu0 0.0
    %1023 = vmatpush.msra.mxu0 0.0
    %1024 = vmatpush.msra.mxu0 0.0
    %1025 = vmatpush.msra.mxu0 0.0
    %1026 = vmatpush.msra.mxu0 0.0
    %1027 = vmatpush.msra.mxu0 0.0
    %1028 = vmatpush.msra.mxu0 0.0
    %1029 = vmatpush.msra.mxu0 0.0
    %1030 = vmatpush.msra.mxu0 0.0
    %1031 = vmatpush.msra.mxu0 %v441
    %1032 = vmatmul.f32.gmra.mxu0 %v1014
    %v1033 = vpop.f32.mrf.mxu0
    %v1034 = vadd.f32 0.0, %v1033
    %1035 = vdwg.mxu0
    %v1037 = vsel %vm443, %v873, 0
    %v1040 = vsel %vm443, %v896, 0
    %1042 = vmatpush.msra.mxu0 0.0
    %1043 = vmatpush.msra.mxu0 0.0
    %1044 = vmatpush.msra.mxu0 0.0
    %1045 = vmatpush.msra.mxu0 0.0
    %1046 = vmatpush.msra.mxu0 0.0
    %1047 = vmatpush.msra.mxu0 0.0
    %1048 = vmatpush.msra.mxu0 0.0
    %1049 = vmatpush.msra.mxu0 0.0
    %1050 = vmatpush.msra.mxu0 0.0
    %1051 = vmatpush.msra.mxu0 0.0
    %1052 = vmatpush.msra.mxu0 0.0
    %1053 = vmatpush.msra.mxu0 0.0
    %1054 = vmatpush.msra.mxu0 0.0
    %1055 = vmatpush.msra.mxu0 0.0
    %1056 = vmatpush.msra.mxu0 0.0
    %1057 = vmatpush.msra.mxu0 %v54
    %1058 = vmatmul.f32.gmra.mxu0 %v1037
    %v1059 = vpop.f32.mrf.mxu0
    %v1060 = vadd.f32 0.0, %v1059
    %1061 = vmatmul.f32.gmra.mxu0 %v1040
    %v1062 = vpop.f32.mrf.mxu0
    %v1063 = vadd.f32 0.0, %v1062
    %1064 = vdwg.mxu0
    %v1066 = vsel %vm443, %v919, 0
    %v1069 = vsel %vm443, %v942, 0
    %1071 = vmatpush.msra.mxu0 0.0
    %1072 = vmatpush.msra.mxu0 0.0
    %1073 = vmatpush.msra.mxu0 0.0
    %1074 = vmatpush.msra.mxu0 0.0
    %1075 = vmatpush.msra.mxu0 0.0
    %1076 = vmatpush.msra.mxu0 0.0
    %1077 = vmatpush.msra.mxu0 0.0
    %1078 = vmatpush.msra.mxu0 0.0
    %1079 = vmatpush.msra.mxu0 0.0
    %1080 = vmatpush.msra.mxu0 0.0
    %1081 = vmatpush.msra.mxu0 0.0
    %1082 = vmatpush.msra.mxu0 0.0
    %1083 = vmatpush.msra.mxu0 0.0
    %1084 = vmatpush.msra.mxu0 0.0
    %1085 = vmatpush.msra.mxu0 0.0
    %1086 = vmatpush.msra.mxu0 %v55
    %1087 = vmatmul.f32.gmra.mxu0 %v1066
    %v1088 = vpop.f32.mrf.mxu0
    %v1089 = vadd.f32 0.0, %v1088
    %1090 = vmatmul.f32.gmra.mxu0 %v1069
    %v1091 = vpop.f32.mrf.mxu0
    %v1092 = vadd.f32 0.0, %v1091
    %1093 = vdwg.mxu0
    %v1095 = vsel %vm443, %v965, 0
    %v1098 = vsel %vm443, %v988, 0
    %1100 = vmatpush.msra.mxu0 0.0
    %1101 = vmatpush.msra.mxu0 0.0
    %1102 = vmatpush.msra.mxu0 0.0
    %1103 = vmatpush.msra.mxu0 0.0
    %1104 = vmatpush.msra.mxu0 0.0
    %1105 = vmatpush.msra.mxu0 0.0
    %1106 = vmatpush.msra.mxu0 0.0
    %1107 = vmatpush.msra.mxu0 0.0
    %1108 = vmatpush.msra.mxu0 0.0
    %1109 = vmatpush.msra.mxu0 0.0
    %1110 = vmatpush.msra.mxu0 0.0
    %1111 = vmatpush.msra.mxu0 0.0
    %1112 = vmatpush.msra.mxu0 0.0
    %1113 = vmatpush.msra.mxu0 0.0
    %1114 = vmatpush.msra.mxu0 0.0
    %1115 = vmatpush.msra.mxu0 %v56
    %1116 = vmatmul.f32.gmra.mxu0 %v1095
    %v1117 = vpop.f32.mrf.mxu0
    %v1118 = vadd.f32 0.0, %v1117
    %1119 = vmatmul.f32.gmra.mxu0 %v1098
    %v1120 = vpop.f32.mrf.mxu0
    %v1121 = vadd.f32 0.0, %v1120
    %1122 = vdwg.mxu0
    %v1124 = vsel %vm443, %v1011, 0
    %v1127 = vsel %vm443, %v1034, 0
    %1129 = vmatpush.msra.mxu0 0.0
    %1130 = vmatpush.msra.mxu0 0.0
    %1131 = vmatpush.msra.mxu0 0.0
    %1132 = vmatpush.msra.mxu0 0.0
    %1133 = vmatpush.msra.mxu0 0.0
    %1134 = vmatpush.msra.mxu0 0.0
    %1135 = vmatpush.msra.mxu0 0.0
    %1136 = vmatpush.msra.mxu0 0.0
    %1137 = vmatpush.msra.mxu0 0.0
    %1138 = vmatpush.msra.mxu0 0.0
    %1139 = vmatpush.msra.mxu0 0.0
    %1140 = vmatpush.msra.mxu0 0.0
    %1141 = vmatpush.msra.mxu0 0.0
    %1142 = vmatpush.msra.mxu0 0.0
    %1143 = vmatpush.msra.mxu0 0.0
    %1144 = vmatpush.msra.mxu0 %v57
    %1145 = vmatmul.f32.gmra.mxu0 %v1124
    %v1146 = vpop.f32.mrf.mxu0
    %v1147 = vadd.f32 0.0, %v1146
    %1148 = vmatmul.f32.gmra.mxu0 %v1127
    %v1149 = vpop.f32.mrf.mxu0
    %v1150 = vadd.f32 0.0, %v1149
    %1151 = vdwg.mxu0
    %v1152 = vsel %vm67, %v1060, 0.0
    %v1153 = vsel %vm67, %v1089, 0.0
    %v1154 = vadd.f32 %v1152, %v1153
    %v1155 = vsel %vm67, %v1118, 0.0
    %v1156 = vadd.f32 %v1154, %v1155
    %v1157 = vsel %vm67, %v1147, 0.0
    %v1158 = vadd.f32 %v1156, %v1157
    %v1159 = vsel %vm67, %v1063, 0.0
    %v1160 = vsel %vm67, %v1092, 0.0
    %v1161 = vadd.f32 %v1159, %v1160
    %v1162 = vsel %vm67, %v1121, 0.0
    %v1163 = vadd.f32 %v1161, %v1162
    %v1164 = vsel %vm67, %v1150, 0.0
    %v1165 = vadd.f32 %v1163, %v1164
    %v1166 = vperm.slane %v66, 4
    %v1167 = vadd.f32 %v1158, %v1166
    %v1168 = vadd.f32 %v1165, %v1166
    %v1169 = vadd.f32 %v40, %v1167
    %v1170 = vadd.f32 %v41, %v1168
    %v1171 = vsel %vm67, %v1169, 0.0
    %1172 = vadd.xlane.f32.xlu0 %v1171
    %v1173 = vpop.xlane.xlu0 %1172
    %v1174 = vsel %vm67, %v1170, 0.0
    %1175 = vadd.xlane.f32.xlu0 %v1174
    %v1176 = vpop.xlane.xlu0 %1175
    %v1177 = vmul.f32 %v1173, %v80
    %v1178 = vmul.f32 %v1176, %v80
    %v1179 = vsub.f32 %v1169, %v1177
    %v1180 = vsub.f32 %v1170, %v1178
    %v1181 = vmul.f32 %v1179, %v1179
    %v1182 = vmul.f32 %v1180, %v1180
    %v1183 = vsel %vm67, %v1181, 0.0
    %1184 = vadd.xlane.f32.xlu0 %v1183
    %v1185 = vpop.xlane.xlu0 %1184
    %v1186 = vsel %vm67, %v1182, 0.0
    %1187 = vadd.xlane.f32.xlu0 %v1186
    %v1188 = vpop.xlane.xlu0 %1187
    %v1189 = vmul.f32 %v1185, %v80
    %v1190 = vmul.f32 %v1188, %v80
    %v1191 = vadd.f32 %v1189, 1e-05
    %v1192 = vadd.f32 %v1190, 1e-05
    %v1193 = vrsqrt.pop %v1191
    %v1194 = vmul.f32 %v1193, %v1191
    %v1195 = vmul.f32 %v1194, %v1193
    %v1196 = vmul.f32 0.5, %v1195
    %v1197 = vsub.f32 1.5, %v1196
    %v1198 = vmul.f32 %v1193, %v1197
    %vm1199 = vweird.f32 %v1191
    %vm1200 = vweird.f32 %v1193
    %vm1201 = vmor %vm1199, %vm1200
    %v1202 = vsel %vm1201, %v1193, %v1198
    %v1203 = vrsqrt.pop %v1192
    %v1204 = vmul.f32 %v1203, %v1192
    %v1205 = vmul.f32 %v1204, %v1203
    %v1206 = vmul.f32 0.5, %v1205
    %v1207 = vsub.f32 1.5, %v1206
    %v1208 = vmul.f32 %v1203, %v1207
    %vm1209 = vweird.f32 %v1192
    %vm1210 = vweird.f32 %v1203
    %vm1211 = vmor %vm1209, %vm1210
    %v1212 = vsel %vm1211, %v1203, %v1208
    %v1213 = vmul.f32 %v1179, %v1202
    %v1214 = vmul.f32 %v1180, %v1212
    %v1215 = vperm.slane %v66, 2
    %v1216 = vmul.f32 %v1213, %v1215
    %v1217 = vmul.f32 %v1214, %v1215
    %v1218 = vperm.slane %v66, 3
    %v1219 = vadd.f32 %v1216, %v1218
    %v1220 = vadd.f32 %v1217, %v1218
    %v1221 = vperm.slane %v66, 6
    %v1223 = vsel %vm67, %v1219, 0
    %v1226 = vsel %vm67, %v1220, 0
    %1228 = vmatpush.msra.mxu0 0.0
    %1229 = vmatpush.msra.mxu0 0.0
    %1230 = vmatpush.msra.mxu0 0.0
    %1231 = vmatpush.msra.mxu0 0.0
    %1232 = vmatpush.msra.mxu0 0.0
    %1233 = vmatpush.msra.mxu0 0.0
    %1234 = vmatpush.msra.mxu0 0.0
    %1235 = vmatpush.msra.mxu0 0.0
    %1236 = vmatpush.msra.mxu0 0.0
    %1237 = vmatpush.msra.mxu0 0.0
    %1238 = vmatpush.msra.mxu0 0.0
    %1239 = vmatpush.msra.mxu0 0.0
    %1240 = vmatpush.msra.mxu0 %v61
    %1241 = vmatpush.msra.mxu0 %v60
    %1242 = vmatpush.msra.mxu0 %v59
    %1243 = vmatpush.msra.mxu0 %v58
    %1244 = vmatmul.f32.gmra.mxu0 %v1223
    %v1245 = vpop.f32.mrf.mxu0
    %v1246 = vadd.f32 %v1221, %v1245
    %1247 = vmatmul.f32.gmra.mxu0 %v1226
    %v1248 = vpop.f32.mrf.mxu0
    %v1249 = vadd.f32 %v1221, %v1248
    %1250 = vdwg.mxu0
    %v1251 = vmul.f32 %v1246, 0.5
    %v1252 = vmul.f32 %v1249, 0.5
    %v1253 = vmul.f32 %v1246, 0.70710677
    %v1254 = vmul.f32 %v1249, 0.70710677
    %v1255 = vmul.f32 %v1253, %v1253
    %v1256 = vmin.f32 16.0, %v1255
    %v1257 = vmul.f32 %v1256, 2.1237322e-06
    %v1258 = vadd.f32 %v1257, 0.00028619796
    %v1259 = vmul.f32 %v1256, %v1258
    %v1260 = vadd.f32 %v1259, 0.0036580483
    %v1261 = vmul.f32 %v1256, %v1260
    %v1262 = vadd.f32 %v1261, 0.05243302
    %v1263 = vmul.f32 %v1256, %v1262
    %v1264 = vadd.f32 %v1263, 0.18741608
    %v1265 = vmul.f32 %v1256, %v1264
    %v1266 = vadd.f32 %v1265, 1.1283791
    %v1267 = vmul.f32 %v1253, %v1266
    %v1268 = vmul.f32 %v1256, 3.8918573e-05
    %v1269 = vadd.f32 %v1268, 0.001143296
    %v1270 = vmul.f32 %v1256, %v1269
    %v1271 = vadd.f32 %v1270, 0.014752088
    %v1272 = vmul.f32 %v1256, %v1271
    %v1273 = vadd.f32 %v1272, 0.112945676
    %v1274 = vmul.f32 %v1256, %v1273
    %v1275 = vadd.f32 %v1274, 0.4994258
    %v1276 = vmul.f32 %v1256, %v1275
    %v1277 = vadd.f32 %v1276, 1.0
    %v1278 = vrcp.pop %v1277
    %v1279 = vmul.f32 %v1277, %v1278
    %v1280 = vsub.f32 1.0, %v1279
    %v1281 = vmul.f32 %v1278, %v1280
    %v1282 = vadd.f32 %v1278, %v1281
    %vm1283 = vweird.f32 %v1277
    %vm1284 = vweird.f32 %v1278
    %vm1285 = vmor %vm1283, %vm1284
    %v1286 = vsel %vm1285, %v1278, %v1282
    %v1287 = vand.u32 2147483647, %v1277
    %vm1288 = vcmp.eq.f32.partialorder %v1287, 8.507059e+37
    %v1289 = vand.u32 %v1277, 2147483648
    %v1290 = vor.u32 1.1754944e-38, %v1289
    %v1291 = vsel %vm1288, %v1290, %v1286
    %v1292 = vmul.f32 %v1267, %v1291
    %v1293 = vmin.f32 %v1292, 1.0
    %v1294 = vmax.f32 %v1293, -1.0
    %v1295 = vmul.f32 %v1254, %v1254
    %v1296 = vmin.f32 16.0, %v1295
    %v1297 = vmul.f32 %v1296, 2.1237322e-06
    %v1298 = vadd.f32 %v1297, 0.00028619796
    %v1299 = vmul.f32 %v1296, %v1298
    %v1300 = vadd.f32 %v1299, 0.0036580483
    %v1301 = vmul.f32 %v1296, %v1300
    %v1302 = vadd.f32 %v1301, 0.05243302
    %v1303 = vmul.f32 %v1296, %v1302
    %v1304 = vadd.f32 %v1303, 0.18741608
    %v1305 = vmul.f32 %v1296, %v1304
    %v1306 = vadd.f32 %v1305, 1.1283791
    %v1307 = vmul.f32 %v1254, %v1306
    %v1308 = vmul.f32 %v1296, 3.8918573e-05
    %v1309 = vadd.f32 %v1308, 0.001143296
    %v1310 = vmul.f32 %v1296, %v1309
    %v1311 = vadd.f32 %v1310, 0.014752088
    %v1312 = vmul.f32 %v1296, %v1311
    %v1313 = vadd.f32 %v1312, 0.112945676
    %v1314 = vmul.f32 %v1296, %v1313
    %v1315 = vadd.f32 %v1314, 0.4994258
    %v1316 = vmul.f32 %v1296, %v1315
    %v1317 = vadd.f32 %v1316, 1.0
    %v1318 = vrcp.pop %v1317
    %v1319 = vmul.f32 %v1317, %v1318
    %v1320 = vsub.f32 1.0, %v1319
    %v1321 = vmul.f32 %v1318, %v1320
    %v1322 = vadd.f32 %v1318, %v1321
    %vm1323 = vweird.f32 %v1317
    %vm1324 = vweird.f32 %v1318
    %vm1325 = vmor %vm1323, %vm1324
    %v1326 = vsel %vm1325, %v1318, %v1322
    %v1327 = vand.u32 2147483647, %v1317
    %vm1328 = vcmp.eq.f32.partialorder %v1327, 8.507059e+37
    %v1329 = vand.u32 %v1317, 2147483648
    %v1330 = vor.u32 1.1754944e-38, %v1329
    %v1331 = vsel %vm1328, %v1330, %v1326
    %v1332 = vmul.f32 %v1307, %v1331
    %v1333 = vmin.f32 %v1332, 1.0
    %v1334 = vmax.f32 %v1333, -1.0
    %v1335 = vadd.f32 %v1294, 1.0
    %v1336 = vadd.f32 %v1334, 1.0
    %v1337 = vmul.f32 %v1251, %v1335
    %v1338 = vmul.f32 %v1252, %v1336
    %v1339 = vperm.slane %v66, 5
    %vm1340 = vcmask 523264
    %v1342 = vsel %vm1340, %v1337, 0
    %v1345 = vsel %vm1340, %v1338, 0
    %v1348 = vsel %vm1340, %v62, 0
    %v1351 = vsel %vm1340, %v63, 0
    %v1354 = vsel %vm1340, %v64, 0
    %v1357 = vsel %vm1340, %v65, 0
    %1359 = vmatpush.xpose.msra.mxu0 0.0
    %1360 = vmatpush.xpose.msra.mxu0 0.0
    %1361 = vmatpush.xpose.msra.mxu0 0.0
    %1362 = vmatpush.xpose.msra.mxu0 0.0
    %1363 = vmatpush.xpose.msra.mxu0 0.0
    %1364 = vmatpush.xpose.msra.mxu0 0.0
    %1365 = vmatpush.xpose.msra.mxu0 0.0
    %1366 = vmatpush.xpose.msra.mxu0 0.0
    %1367 = vmatpush.xpose.msra.mxu0 0.0
    %1368 = vmatpush.xpose.msra.mxu0 0.0
    %1369 = vmatpush.xpose.msra.mxu0 0.0
    %1370 = vmatpush.xpose.msra.mxu0 0.0
    %1371 = vmatpush.xpose.msra.mxu0 %v1357
    %1372 = vmatpush.xpose.msra.mxu0 %v1354
    %1373 = vmatpush.xpose.msra.mxu0 %v1351
    %1374 = vmatpush.xpose.msra.mxu0 %v1348
    %1375 = vmatmul.f32.gmra.mxu0 %v1342
    %v1376 = vpop.f32.mrf.mxu0
    %v1377 = vadd.f32 %v1339, %v1376
    %1378 = vmatmul.f32.gmra.mxu0 %v1345
    %v1379 = vpop.f32.mrf.mxu0
    %v1380 = vadd.f32 %v1339, %v1379
    %1381 = vdwg.mxu0
    %v1382 = vadd.f32 %v1169, %v1377
    %v1383 = vadd.f32 %v1170, %v1380
    %1384 = vst.msk [vmem:[#allocation2] sm:$0xff] %vm67, %v1382
    %1385 = vst.msk [vmem:[#allocation2 + $0x8] sm:$0xff] %vm67, %v1383
    // Predicated region
    $region22: #{tpu_custom_call.1} parent=1 // pred_check
      %p1386 = pneg %p31
    $region23: #{tpu_custom_call.1} parent=1 // pred_check_branch
      %1388 = sbr.rel (%p1386) target = $region25
    $region24: #{tpu_custom_call.1} parent=1 // pred_region
      %1389 = vst.msk [vmem:[#allocation6] sm:$0xff] %vm67, %v1382
      %1390 = vst.msk [vmem:[#allocation6 + $0x8] sm:$0xff] %vm67, %v1383
    $region25: #{tpu_custom_call.1} parent=1 // pred_fallthru
      _
    // Predicated region
    $region26: #{tpu_custom_call.1} parent=1 // pred_check
      _
    $region27: #{tpu_custom_call.1} parent=1 // pred_check_branch
      %1392 = sbr.rel (0) target = $region29
    $region28: #{tpu_custom_call.1} parent=1 // pred_region
      %1394 = vsyncadd [#allocation5], 0
      %s1395 = sshll.u32 [#allocation6], 4
      %s1396 = int_to_ptr.vmem [resolvable:$true] %s1395
      %s1397 = sshll.u32 %s3, 4
      %s1398 = int_to_ptr.hbm [resolvable:$true] %s1397
      %1403 = dma.vmem_to_hbm [thread:$0]  %s1396, 256, %s1398, [#allocation5], 128, 128, 8
    $region29: #{tpu_custom_call.1} parent=1 // pred_fallthru
      _
    // Predicated region
    $region30: #{tpu_custom_call.1} parent=1 // pred_check
      _
    $region31: #{tpu_custom_call.1} parent=1 // pred_check_branch
      %1405 = sbr.rel (0) target = $region33
    $region32: #{tpu_custom_call.1} parent=1 // pred_region
      %1407 = dma.done [#allocation5], 256
    $region33: #{tpu_custom_call.1} parent=1 // pred_fallthru
      _
    %1408 = vsyncpa [#allocation4], 1
    %1409 = vsyncpa [#allocation5], 1

</llo_original>
